<compile_context>
chip_gen: v6e
topology: v6e:2x2x1
jax: 0.10.0
libtpu: 0.0.40
codegen_flags: <defaults>
</compile_context>

<pallas_src>
import functools

import jax
import jax.numpy as jnp
from jax.experimental import pallas as pl
from jax.experimental.pallas import tpu as pltpu

LANE = 128


def _round_up(v, m):
    return (v + m - 1) // m * m


# ---------------------------------------------------------------------------
# Single fused Pallas kernel: all SAGE layers (both chains packed on lanes),
# final SAGEConv and log_softmax.
# ---------------------------------------------------------------------------

def _fused_graphsage_kernel(*refs, num_total, out_valid):
    # refs = a, deg_inv, x, (w_i, b_i) * num_total, o
    a_ref, dinv_ref, x_ref = refs[0], refs[1], refs[2]
    layer_refs = refs[3:3 + 2 * num_total]
    o_ref = refs[-1]

    a = a_ref[...]                 # bf16 [Np, Np]  (exact 0/1 edge counts)
    dinv = dinv_ref[...]           # f32  [Np, 1]   (1 / in-degree)
    h = x_ref[...]                 # bf16 [Np, C0_pad]

    logits = None
    for i in range(num_total):
        w = layer_refs[2 * i][...]       # bf16 [2*Cin, Cout]  stacked [Wl ; Wr']
        b = layer_refs[2 * i + 1][...]   # f32  [1, Cout]
        # Mean aggregation: counts matmul (MXU, bf16) + f32 per-row scale (VPU).
        agg = jnp.dot(a, h, preferred_element_type=jnp.float32) * dinv
        # Single fused K=2*Cin contraction replacing agg@Wl + h@Wr'.
        h2 = jnp.concatenate([agg.astype(jnp.bfloat16), h], axis=-1)
        out = jnp.dot(h2, w, preferred_element_type=jnp.float32) + b
        if i < num_total - 2:            # ReLU on chain layers except the last
            out = jnp.maximum(out, 0.0)
        # TODO(synk): dropout(p=0.5) is identity in eval mode (training=False).
        if i == num_total - 1:
            logits = out                 # keep f32 for the softmax epilogue
        else:
            h = out.astype(jnp.bfloat16)

    # Mask padded output lanes so they do not perturb the log_softmax (f32 only;
    # -1e30 would overflow bf16).
    lane = jax.lax.broadcasted_iota(jnp.int32, logits.shape, 1)
    logits = jnp.where(lane < out_valid, logits, -1e30)

    m = jnp.max(logits, axis=1, keepdims=True)
    z = logits - m
    lse = jnp.log(jnp.sum(jnp.exp(z), axis=1, keepdims=True))
    o_ref[...] = z - lse


def _full_spec(shape):
    return pl.BlockSpec(shape, lambda: tuple(0 for _ in shape))


def fused_graphsage_call(a_bf16, deg_inv, x_pad, layers, *, out_pad, out_valid):
    n_pad = x_pad.shape[0]
    num_total = len(layers)
    kernel = functools.partial(_fused_graphsage_kernel,
                               num_total=num_total, out_valid=out_valid)
    in_arrays = [a_bf16, deg_inv, x_pad]
    for (w, b) in layers:
        in_arrays += [w, b]
    in_specs = [_full_spec(arr.shape) for arr in in_arrays]
    return pl.pallas_call(
        kernel,
        out_shape=jax.ShapeDtypeStruct((n_pad, out_pad), jnp.float32),
        in_specs=in_specs,
        out_specs=_full_spec((n_pad, out_pad)),
        # Tiny footprint here; keep within the conservative cross-chip scoped
        # default (safe on v7x's 64 MiB physical VMEM as well).
        compiler_params=pltpu.CompilerParams(vmem_limit_bytes=32 * 1024 * 1024),
    )(*in_arrays)


# ---------------------------------------------------------------------------
# Plain-JAX glue: parameters (PyTorch-structured), packing, adjacency, forward
# ---------------------------------------------------------------------------

def _init_linear(key, cin, cout):
    kw, kb = jax.random.split(key)
    w = jax.random.normal(kw, (cin, cout), jnp.float32) * (1.0 / jnp.sqrt(cin))
    b = jax.random.normal(kb, (1, cout), jnp.float32) * 0.01
    return w, b


def _init_sage(key, cin, cout):
    k1, _, k3 = jax.random.split(key, 3)
    wl, b = _init_linear(k1, cin, cout)   # lin_l (aggregated neighbors, has bias)
    wr = jax.random.normal(k3, (cin, cout), jnp.float32) * (1.0 / jnp.sqrt(cin))  # lin_r
    return {"wl": wl, "wr": wr, "b": b}


def init_params(key, in_channels, hidden_channels, out_channels, num_layers):
    params = {}
    keys = jax.random.split(key, 2 * (2 * num_layers - 1) + 1)
    ki = 0
    for chain in ("chain1", "chain2"):
        for i in range(num_layers):
            cin = in_channels if i == 0 else hidden_channels
            params[f"{chain}_conv_{i}"] = _init_sage(keys[ki], cin, hidden_channels)
            ki += 1
            if i > 0:
                w, b = _init_linear(keys[ki], hidden_channels, hidden_channels)
                params[f"{chain}_residual_{i - 1}"] = {"w": w, "b": b}
                ki += 1
    params["final_conv"] = _init_sage(keys[ki], 2 * hidden_channels, out_channels)
    return params


def pack_params(params, in_channels, hidden, out_channels, num_layers):
    """Fold residuals into Wr/b, pack chains on lanes, stack [Wl ; Wr'], pad to 128."""
    H = hidden
    cin_pad = _round_up(in_channels, LANE)
    pack_pad = _round_up(2 * H, LANE)
    out_pad = _round_up(out_channels, LANE)

    def place(rows, cols, blocks):
        w = jnp.zeros((rows, cols), jnp.float32)
        for (r0, c0, blk) in blocks:
            w = w.at[r0:r0 + blk.shape[0], c0:c0 + blk.shape[1]].set(blk)
        return w

    layers = []
    for i in range(num_layers):
        c1 = params[f"chain1_conv_{i}"]
        c2 = params[f"chain2_conv_{i}"]
        if i == 0:
            cin = cin_pad
            wl_blocks = [(0, 0, c1["wl"]), (0, H, c2["wl"])]
            wr_blocks = [(cin, 0, c1["wr"]), (cin, H, c2["wr"])]
            b_blocks = [(0, 0, c1["b"]), (0, H, c2["b"])]
        else:
            cin = pack_pad
            r1 = params[f"chain1_residual_{i - 1}"]
            r2 = params[f"chain2_residual_{i - 1}"]
            wl_blocks = [(0, 0, c1["wl"]), (H, H, c2["wl"])]
            wr_blocks = [(cin + 0, 0, c1["wr"] + r1["w"]),
                         (cin + H, H, c2["wr"] + r2["w"])]
            b_blocks = [(0, 0, c1["b"] + r1["b"]), (0, H, c2["b"] + r2["b"])]
        w = place(2 * cin, pack_pad, wl_blocks + wr_blocks)
        b = place(1, pack_pad, b_blocks)
        layers.append((w.astype(jnp.bfloat16), b))

    fp = params["final_conv"]
    wf = place(2 * pack_pad, out_pad,
               [(0, 0, fp["wl"]), (pack_pad, 0, fp["wr"])])
    bf = place(1, out_pad, [(0, 0, fp["b"])])
    layers.append((wf.astype(jnp.bfloat16), bf))
    return layers, cin_pad, pack_pad, out_pad


def build_adjacency(edge_index, n_pad):
    """Dense 0/1 edge-count matrix (exact in bf16) + f32 inverse in-degree."""
    # TODO(synk): at realistic N this dense host-side scatter (and the HBM round
    # trip of A) should be replaced by the in-kernel scalar-prefetched gather.
    src = edge_index[0]
    dst = edge_index[1]
    a = jnp.zeros((n_pad, n_pad), jnp.float32)
    a = a.at[dst, src].add(1.0)
    deg = a.sum(axis=1, keepdims=True)
    deg_inv = 1.0 / jnp.maximum(deg, 1.0)
    return a.astype(jnp.bfloat16), deg_inv


def graphsage_forward(params, x, edge_index, in_channels, hidden_channels,
                      out_channels, num_layers):
    n = x.shape[0]
    n_pad = _round_up(n, LANE)   # lane-dense node axis -> full MXU K-depth on A@H
    layers, cin_pad, _, out_pad = pack_params(
        params, in_channels, hidden_channels, out_channels, num_layers)

    a_bf16, deg_inv = build_adjacency(edge_index, n_pad)
    x_pad = jnp.zeros((n_pad, cin_pad), jnp.bfloat16)
    x_pad = x_pad.at[:n, :in_channels].set(x.astype(jnp.bfloat16))

    out = fused_graphsage_call(a_bf16, deg_inv, x_pad, layers,
                               out_pad=out_pad, out_valid=out_channels)
    return out[:n, :out_channels]


# Pure-JAX f32 reference matching the original PyTorch structure (for validation).
def reference_forward(params, x, edge_index, num_layers):
    n = x.shape[0]
    src, dst = edge_index[0], edge_index[1]
    a = jnp.zeros((n, n), jnp.float32).at[dst, src].add(1.0)
    a = a / jnp.maximum(a.sum(axis=1, keepdims=True), 1.0)

    def run_chain(chain):
        h = x
        for i in range(num_layers):
            cp = params[f"{chain}_conv_{i}"]
            out = (a @ h) @ cp["wl"] + cp["b"] + h @ cp["wr"]
            if i > 0:
                rp = params[f"{chain}_residual_{i - 1}"]
                out = out + h @ rp["w"] + rp["b"]
            if i < num_layers - 1:
                out = jnp.maximum(out, 0.0)
            h = out
        return h

    comb = jnp.concatenate([run_chain("chain1"), run_chain("chain2")], axis=1)
    fp = params["final_conv"]
    logits = (a @ comb) @ fp["wl"] + fp["b"] + comb @ fp["wr"]
    return jax.nn.log_softmax(logits, axis=1)


# ---------------------------------------------------------------------------
# Main
# ---------------------------------------------------------------------------

if __name__ == "__main__":
    num_nodes = 64
    in_channels = 16
    hidden_channels = 32
    out_channels = 8
    num_layers = 4
    num_edges = 256

    key = jax.random.PRNGKey(0)
    k_x, k_e1, k_e2, k_p = jax.random.split(key, 4)

    x = jax.random.normal(k_x, (num_nodes, in_channels), jnp.float32)
    src = jax.random.randint(k_e1, (num_edges,), 0, num_nodes, dtype=jnp.int32)
    dst = jax.random.randint(k_e2, (num_edges,), 0, num_nodes, dtype=jnp.int32)
    edge_index = jnp.stack([src, dst], axis=0)  # [2, E], PyG convention

    params = init_params(k_p, in_channels, hidden_channels, out_channels, num_layers)

    out = graphsage_forward(params, x, edge_index, in_channels,
                            hidden_channels, out_channels, num_layers)
    out = jax.block_until_ready(out)

    assert out.shape == (num_nodes, out_channels)
    # rows of log_softmax output should exp-sum to 1
    assert jnp.allclose(jnp.exp(out).sum(axis=1), 1.0, atol=1e-4)
    # kernel (bf16 MXU operands, f32 accumulation/elementwise) vs f32 reference
    ref = reference_forward(params, x, edge_index, num_layers)
    assert jnp.allclose(out, ref, atol=0.15), float(jnp.max(jnp.abs(out - ref)))
    print("KERNEL_OK")
</pallas_src>

<mosaic_0001>
module attributes {stable_mosaic.version = 11 : i64} {
  func.func @_fused_graphsage_kernel(%arg0: memref<128x128xbf16, #tpu.memory_space<vmem>>, %arg1: memref<128x1xf32, #tpu.memory_space<vmem>>, %arg2: memref<128x128xbf16, #tpu.memory_space<vmem>>, %arg3: memref<256x128xbf16, #tpu.memory_space<vmem>>, %arg4: memref<1x128xf32, #tpu.memory_space<vmem>>, %arg5: memref<256x128xbf16, #tpu.memory_space<vmem>>, %arg6: memref<1x128xf32, #tpu.memory_space<vmem>>, %arg7: memref<256x128xbf16, #tpu.memory_space<vmem>>, %arg8: memref<1x128xf32, #tpu.memory_space<vmem>>, %arg9: memref<256x128xbf16, #tpu.memory_space<vmem>>, %arg10: memref<1x128xf32, #tpu.memory_space<vmem>>, %arg11: memref<256x128xbf16, #tpu.memory_space<vmem>>, %arg12: memref<1x128xf32, #tpu.memory_space<vmem>>, %arg13: memref<128x128xf32, #tpu.memory_space<vmem>>) attributes {dimension_semantics = [], scalar_prefetch = 0 : i64, scratch_operands = 0 : i64, tpu.core_type = #tpu.core_type<tc>} {
    %c0 = arith.constant 0 : index
    %c0_0 = arith.constant 0 : index
    %0 = vector.load %arg0[%c0, %c0_0] : memref<128x128xbf16, #tpu.memory_space<vmem>>, vector<128x128xbf16>
    %c0_1 = arith.constant 0 : index
    %c0_2 = arith.constant 0 : index
    %1 = vector.load %arg1[%c0_1, %c0_2] : memref<128x1xf32, #tpu.memory_space<vmem>>, vector<128x1xf32>
    %c0_3 = arith.constant 0 : index
    %c0_4 = arith.constant 0 : index
    %2 = vector.load %arg2[%c0_3, %c0_4] : memref<128x128xbf16, #tpu.memory_space<vmem>>, vector<128x128xbf16>
    %c0_5 = arith.constant 0 : index
    %c0_6 = arith.constant 0 : index
    %3 = vector.load %arg3[%c0_5, %c0_6] : memref<256x128xbf16, #tpu.memory_space<vmem>>, vector<256x128xbf16>
    %c0_7 = arith.constant 0 : index
    %c0_8 = arith.constant 0 : index
    %4 = vector.load %arg4[%c0_7, %c0_8] : memref<1x128xf32, #tpu.memory_space<vmem>>, vector<1x128xf32>
    %cst = arith.constant dense<0.000000e+00> : vector<128x128xf32>
    %5 = tpu.matmul %0, %2, %cst {dimension_numbers = #tpu.dot_dimension_numbers<[1], [0], [0], [1], [0, 0, 1, 1], [], []>} : vector<128x128xbf16>, vector<128x128xbf16>, vector<128x128xf32> -> vector<128x128xf32>
    %6 = vector.broadcast %1 : vector<128x1xf32> to vector<128x128xf32>
    %7 = arith.mulf %5, %6 : vector<128x128xf32>
    %8 = arith.truncf %7 : vector<128x128xf32> to vector<128x128xbf16>
    %9 = tpu.concatenate %8, %2 in 1 : vector<128x128xbf16>, vector<128x128xbf16> -> vector<128x256xbf16>
    %cst_9 = arith.constant dense<0.000000e+00> : vector<128x128xf32>
    %10 = tpu.matmul %9, %3, %cst_9 {dimension_numbers = #tpu.dot_dimension_numbers<[1], [0], [0], [1], [0, 0, 1, 1], [], []>} : vector<128x256xbf16>, vector<256x128xbf16>, vector<128x128xf32> -> vector<128x128xf32>
    %11 = vector.broadcast %4 : vector<1x128xf32> to vector<128x128xf32>
    %12 = arith.addf %10, %11 : vector<128x128xf32>
    %cst_10 = arith.constant 0.000000e+00 : f32
    %13 = vector.broadcast %cst_10 : f32 to vector<128x128xf32>
    %14 = arith.maximumf %12, %13 : vector<128x128xf32>
    %15 = arith.truncf %14 : vector<128x128xf32> to vector<128x128xbf16>
    %c0_11 = arith.constant 0 : index
    %c0_12 = arith.constant 0 : index
    %16 = vector.load %arg5[%c0_11, %c0_12] : memref<256x128xbf16, #tpu.memory_space<vmem>>, vector<256x128xbf16>
    %c0_13 = arith.constant 0 : index
    %c0_14 = arith.constant 0 : index
    %17 = vector.load %arg6[%c0_13, %c0_14] : memref<1x128xf32, #tpu.memory_space<vmem>>, vector<1x128xf32>
    %cst_15 = arith.constant dense<0.000000e+00> : vector<128x128xf32>
    %18 = tpu.matmul %0, %15, %cst_15 {dimension_numbers = #tpu.dot_dimension_numbers<[1], [0], [0], [1], [0, 0, 1, 1], [], []>} : vector<128x128xbf16>, vector<128x128xbf16>, vector<128x128xf32> -> vector<128x128xf32>
    %19 = vector.broadcast %1 : vector<128x1xf32> to vector<128x128xf32>
    %20 = arith.mulf %18, %19 : vector<128x128xf32>
    %21 = arith.truncf %20 : vector<128x128xf32> to vector<128x128xbf16>
    %22 = tpu.concatenate %21, %15 in 1 : vector<128x128xbf16>, vector<128x128xbf16> -> vector<128x256xbf16>
    %cst_16 = arith.constant dense<0.000000e+00> : vector<128x128xf32>
    %23 = tpu.matmul %22, %16, %cst_16 {dimension_numbers = #tpu.dot_dimension_numbers<[1], [0], [0], [1], [0, 0, 1, 1], [], []>} : vector<128x256xbf16>, vector<256x128xbf16>, vector<128x128xf32> -> vector<128x128xf32>
    %24 = vector.broadcast %17 : vector<1x128xf32> to vector<128x128xf32>
    %25 = arith.addf %23, %24 : vector<128x128xf32>
    %cst_17 = arith.constant 0.000000e+00 : f32
    %26 = vector.broadcast %cst_17 : f32 to vector<128x128xf32>
    %27 = arith.maximumf %25, %26 : vector<128x128xf32>
    %28 = arith.truncf %27 : vector<128x128xf32> to vector<128x128xbf16>
    %c0_18 = arith.constant 0 : index
    %c0_19 = arith.constant 0 : index
    %29 = vector.load %arg7[%c0_18, %c0_19] : memref<256x128xbf16, #tpu.memory_space<vmem>>, vector<256x128xbf16>
    %c0_20 = arith.constant 0 : index
    %c0_21 = arith.constant 0 : index
    %30 = vector.load %arg8[%c0_20, %c0_21] : memref<1x128xf32, #tpu.memory_space<vmem>>, vector<1x128xf32>
    %cst_22 = arith.constant dense<0.000000e+00> : vector<128x128xf32>
    %31 = tpu.matmul %0, %28, %cst_22 {dimension_numbers = #tpu.dot_dimension_numbers<[1], [0], [0], [1], [0, 0, 1, 1], [], []>} : vector<128x128xbf16>, vector<128x128xbf16>, vector<128x128xf32> -> vector<128x128xf32>
    %32 = vector.broadcast %1 : vector<128x1xf32> to vector<128x128xf32>
    %33 = arith.mulf %31, %32 : vector<128x128xf32>
    %34 = arith.truncf %33 : vector<128x128xf32> to vector<128x128xbf16>
    %35 = tpu.concatenate %34, %28 in 1 : vector<128x128xbf16>, vector<128x128xbf16> -> vector<128x256xbf16>
    %cst_23 = arith.constant dense<0.000000e+00> : vector<128x128xf32>
    %36 = tpu.matmul %35, %29, %cst_23 {dimension_numbers = #tpu.dot_dimension_numbers<[1], [0], [0], [1], [0, 0, 1, 1], [], []>} : vector<128x256xbf16>, vector<256x128xbf16>, vector<128x128xf32> -> vector<128x128xf32>
    %37 = vector.broadcast %30 : vector<1x128xf32> to vector<128x128xf32>
    %38 = arith.addf %36, %37 : vector<128x128xf32>
    %cst_24 = arith.constant 0.000000e+00 : f32
    %39 = vector.broadcast %cst_24 : f32 to vector<128x128xf32>
    %40 = arith.maximumf %38, %39 : vector<128x128xf32>
    %41 = arith.truncf %40 : vector<128x128xf32> to vector<128x128xbf16>
    %c0_25 = arith.constant 0 : index
    %c0_26 = arith.constant 0 : index
    %42 = vector.load %arg9[%c0_25, %c0_26] : memref<256x128xbf16, #tpu.memory_space<vmem>>, vector<256x128xbf16>
    %c0_27 = arith.constant 0 : index
    %c0_28 = arith.constant 0 : index
    %43 = vector.load %arg10[%c0_27, %c0_28] : memref<1x128xf32, #tpu.memory_space<vmem>>, vector<1x128xf32>
    %cst_29 = arith.constant dense<0.000000e+00> : vector<128x128xf32>
    %44 = tpu.matmul %0, %41, %cst_29 {dimension_numbers = #tpu.dot_dimension_numbers<[1], [0], [0], [1], [0, 0, 1, 1], [], []>} : vector<128x128xbf16>, vector<128x128xbf16>, vector<128x128xf32> -> vector<128x128xf32>
    %45 = vector.broadcast %1 : vector<128x1xf32> to vector<128x128xf32>
    %46 = arith.mulf %44, %45 : vector<128x128xf32>
    %47 = arith.truncf %46 : vector<128x128xf32> to vector<128x128xbf16>
    %48 = tpu.concatenate %47, %41 in 1 : vector<128x128xbf16>, vector<128x128xbf16> -> vector<128x256xbf16>
    %cst_30 = arith.constant dense<0.000000e+00> : vector<128x128xf32>
    %49 = tpu.matmul %48, %42, %cst_30 {dimension_numbers = #tpu.dot_dimension_numbers<[1], [0], [0], [1], [0, 0, 1, 1], [], []>} : vector<128x256xbf16>, vector<256x128xbf16>, vector<128x128xf32> -> vector<128x128xf32>
    %50 = vector.broadcast %43 : vector<1x128xf32> to vector<128x128xf32>
    %51 = arith.addf %49, %50 : vector<128x128xf32>
    %52 = arith.truncf %51 : vector<128x128xf32> to vector<128x128xbf16>
    %c0_31 = arith.constant 0 : index
    %c0_32 = arith.constant 0 : index
    %53 = vector.load %arg11[%c0_31, %c0_32] : memref<256x128xbf16, #tpu.memory_space<vmem>>, vector<256x128xbf16>
    %c0_33 = arith.constant 0 : index
    %c0_34 = arith.constant 0 : index
    %54 = vector.load %arg12[%c0_33, %c0_34] : memref<1x128xf32, #tpu.memory_space<vmem>>, vector<1x128xf32>
    %cst_35 = arith.constant dense<0.000000e+00> : vector<128x128xf32>
    %55 = tpu.matmul %0, %52, %cst_35 {dimension_numbers = #tpu.dot_dimension_numbers<[1], [0], [0], [1], [0, 0, 1, 1], [], []>} : vector<128x128xbf16>, vector<128x128xbf16>, vector<128x128xf32> -> vector<128x128xf32>
    %56 = vector.broadcast %1 : vector<128x1xf32> to vector<128x128xf32>
    %57 = arith.mulf %55, %56 : vector<128x128xf32>
    %58 = arith.truncf %57 : vector<128x128xf32> to vector<128x128xbf16>
    %59 = tpu.concatenate %58, %52 in 1 : vector<128x128xbf16>, vector<128x128xbf16> -> vector<128x256xbf16>
    %cst_36 = arith.constant dense<0.000000e+00> : vector<128x128xf32>
    %60 = tpu.matmul %59, %53, %cst_36 {dimension_numbers = #tpu.dot_dimension_numbers<[1], [0], [0], [1], [0, 0, 1, 1], [], []>} : vector<128x256xbf16>, vector<256x128xbf16>, vector<128x128xf32> -> vector<128x128xf32>
    %61 = vector.broadcast %54 : vector<1x128xf32> to vector<128x128xf32>
    %62 = arith.addf %60, %61 : vector<128x128xf32>
    %63 = tpu.iota {dimensions = array<i32: 1>} : vector<128x128xi32>
    %c8_i32 = arith.constant 8 : i32
    %64 = vector.broadcast %c8_i32 : i32 to vector<128x128xi32>
    %65 = arith.cmpi slt, %63, %64 : vector<128x128xi32>
    %cst_37 = arith.constant -1.000000e+30 : f32
    %66 = vector.broadcast %cst_37 : f32 to vector<128x128xf32>
    %67 = arith.select %65, %62, %66 : vector<128x128xi1>, vector<128x128xf32>
    %cst_38 = arith.constant dense<0xFF800000> : vector<128xf32>
    %68 = vector.multi_reduction <maximumf>, %67, %cst_38 [1] : vector<128x128xf32> to vector<128xf32>
    %69 = vector.shape_cast %68 : vector<128xf32> to vector<128x1xf32>
    %70 = vector.broadcast %69 : vector<128x1xf32> to vector<128x128xf32>
    %71 = arith.subf %67, %70 : vector<128x128xf32>
    %72 = math.exp %71 : vector<128x128xf32>
    %cst_39 = arith.constant dense<0.000000e+00> : vector<128xf32>
    %73 = vector.multi_reduction <add>, %72, %cst_39 [1] : vector<128x128xf32> to vector<128xf32>
    %74 = vector.shape_cast %73 : vector<128xf32> to vector<128x1xf32>
    %75 = math.log %74 : vector<128x1xf32>
    %76 = vector.broadcast %75 : vector<128x1xf32> to vector<128x128xf32>
    %77 = arith.subf %71, %76 : vector<128x128xf32>
    %c0_40 = arith.constant 0 : index
    %c0_41 = arith.constant 0 : index
    %78 = vector.load %arg13[%c0_40, %c0_41] : memref<128x128xf32, #tpu.memory_space<vmem>>, vector<128x128xf32>
    tpu.vector_store %arg13[%c0_40, %c0_41], %77 {strides = array<i32>} : memref<128x128xf32, #tpu.memory_space<vmem>>, vector<128x128xf32>,
    return
  }
}

</mosaic_0001>

<llo_original>
// kernel: tpu_custom_call.1
$region0: #{tpu_custom_call.1}
  #allocation0 [shape = 'u32[]', space=smem, size = 0x4, offset = 0x4, fixed_abs, tag = 'smem constant byte address 0x4 - core index']
  #allocation1 [shape = 'u32[144,128]{1,0:T(1,128)}', space=vmem, size = 0x12000, scoped, tag = 'internal scratch']
  %s0 = inlined_call_operand.hbm [shape: bf16[128,128], index: 0, kind: input, shape index: {}]
  %s1 = inlined_call_operand.vmem [shape: f32[128,1], index: 1, kind: input, shape index: {}]
  %s2 = inlined_call_operand.hbm [shape: bf16[128,128], index: 2, kind: input, shape index: {}]
  %s3 = inlined_call_operand.vmem [shape: bf16[256,128], index: 3, kind: input, shape index: {}]
  %s4 = inlined_call_operand.vmem [shape: f32[1,128], index: 4, kind: input, shape index: {}]
  %s5 = inlined_call_operand.hbm [shape: bf16[256,128], index: 5, kind: input, shape index: {}]
  %s6 = inlined_call_operand.vmem [shape: f32[1,128], index: 6, kind: input, shape index: {}]
  %s7 = inlined_call_operand.hbm [shape: bf16[256,128], index: 7, kind: input, shape index: {}]
  %s8 = inlined_call_operand.vmem [shape: f32[1,128], index: 8, kind: input, shape index: {}]
  %s9 = inlined_call_operand.hbm [shape: bf16[256,128], index: 9, kind: input, shape index: {}]
  %s10 = inlined_call_operand.vmem [shape: f32[1,128], index: 10, kind: input, shape index: {}]
  %s11 = inlined_call_operand.hbm [shape: bf16[256,128], index: 11, kind: input, shape index: {}]
  %s12 = inlined_call_operand.vmem [shape: f32[1,128], index: 12, kind: input, shape index: {}]
  %s13 = inlined_call_operand.hbm [shape: f32[128,128], index: 13, kind: output, shape index: {}]
  %s14 = sld [smem:[#allocation0]]
  $region86: #{tpu_custom_call.1} parent=0
    _
  %s16 = ssub.s32 1, %s14
  %s17 = scalar_select 0, %s16, %s14
  $region1: #{tpu_custom_call.1} parent=0
    #allocation2 [shape = 'u8[32768]{0}', space=vmem, size = 0x8000, scoped, tag = 'input window, operand 0, single buffered']
    #allocation3 [shape = 's32[1]{0}', space=sflag, size = 0x4, scoped, tag = 'scoped memory for tpu_custom_call.1']
    #allocation4 [shape = 's32[1]{0}', space=sflag, size = 0x4, scoped, tag = 'scoped memory for tpu_custom_call.1']
    #allocation5 [shape = 'u8[32768]{0}', space=vmem, size = 0x8000, scoped, tag = 'input window, operand 2, single buffered']
    #allocation6 [shape = 's32[1]{0}', space=sflag, size = 0x4, scoped, tag = 'scoped memory for tpu_custom_call.1']
    #allocation7 [shape = 'u8[65536]{0}', space=vmem, size = 0x10000, scoped, tag = 'input window, operand 5, single buffered']
    #allocation8 [shape = 'u8[65536]{0}', space=vmem, size = 0x10000, scoped, tag = 'input window, operand 7, single buffered']
    #allocation9 [shape = 's32[1]{0}', space=sflag, size = 0x4, scoped, tag = 'scoped memory for tpu_custom_call.1']
    #allocation10 [shape = 'u8[65536]{0}', space=vmem, size = 0x10000, scoped, tag = 'input window, operand 9, single buffered']
    #allocation11 [shape = 'u8[65536]{0}', space=vmem, size = 0x10000, scoped, tag = 'input window, operand 11, single buffered']
    #allocation12 [shape = 's32[1]{0}', space=sflag, size = 0x4, scoped, tag = 'scoped memory for tpu_custom_call.1']
    #allocation13 [shape = 'u8[65536]{0}', space=vmem, size = 0x10000, scoped, tag = 'output window, operand 0, single buffered']
    %18 = vsyncpa [#allocation3], 0
    %19 = vsyncpa [#allocation6], 0
    %20 = vsyncpa [#allocation9], 0
    %21 = vsyncpa [#allocation12], 0
    %22 = vsyncpa [#allocation4], 0
    // Predicated region
    $region2: #{tpu_custom_call.1} parent=1 // pred_check
      _
    $region3: #{tpu_custom_call.1} parent=1 // pred_check_branch
      %24 = sbr.rel (0) target = $region5
    $region4: #{tpu_custom_call.1} parent=1 // pred_region
      %s26 = ssub.s32 1024, 1024
      %27 = vsyncadd [#allocation3], %s26
      %s28 = sshll.u32 [#allocation2], 4
      %s29 = int_to_ptr.vmem [resolvable:$true] %s28
      %34 = dma.hbm_to_vmem [thread:$0]  %s0, 1024, %s29, [#allocation3], 64, 64, 4
    $region5: #{tpu_custom_call.1} parent=1 // pred_fallthru
      _
    // Predicated region
    $region6: #{tpu_custom_call.1} parent=1 // pred_check
      _
    $region7: #{tpu_custom_call.1} parent=1 // pred_check_branch
      %36 = sbr.rel (0) target = $region9
    $region8: #{tpu_custom_call.1} parent=1 // pred_region
      _
    $region9: #{tpu_custom_call.1} parent=1 // pred_fallthru
      _
    // Predicated region
    $region10: #{tpu_custom_call.1} parent=1 // pred_check
      _
    $region11: #{tpu_custom_call.1} parent=1 // pred_check_branch
      %38 = sbr.rel (0) target = $region13
    $region12: #{tpu_custom_call.1} parent=1 // pred_region
      %s40 = ssub.s32 1024, 1024
      %41 = vsyncadd [#allocation6], %s40
      %s42 = sshll.u32 [#allocation5], 4
      %s43 = int_to_ptr.vmem [resolvable:$true] %s42
      %48 = dma.hbm_to_vmem [thread:$0]  %s2, 1024, %s43, [#allocation6], 64, 64, 4
    $region13: #{tpu_custom_call.1} parent=1 // pred_fallthru
      _
    // Predicated region
    $region14: #{tpu_custom_call.1} parent=1 // pred_check
      _
    $region15: #{tpu_custom_call.1} parent=1 // pred_check_branch
      %50 = sbr.rel (0) target = $region17
    $region16: #{tpu_custom_call.1} parent=1 // pred_region
      _
    $region17: #{tpu_custom_call.1} parent=1 // pred_fallthru
      _
    // Predicated region
    $region18: #{tpu_custom_call.1} parent=1 // pred_check
      _
    $region19: #{tpu_custom_call.1} parent=1 // pred_check_branch
      %52 = sbr.rel (0) target = $region21
    $region20: #{tpu_custom_call.1} parent=1 // pred_region
      _
    $region21: #{tpu_custom_call.1} parent=1 // pred_fallthru
      _
    // Predicated region
    $region22: #{tpu_custom_call.1} parent=1 // pred_check
      _
    $region23: #{tpu_custom_call.1} parent=1 // pred_check_branch
      %54 = sbr.rel (0) target = $region25
    $region24: #{tpu_custom_call.1} parent=1 // pred_region
      %s56 = ssub.s32 2048, 2048
      %57 = vsyncadd [#allocation6], %s56
      %s58 = sshll.u32 [#allocation7], 4
      %s59 = int_to_ptr.vmem [resolvable:$true] %s58
      %64 = dma.hbm_to_vmem [thread:$0]  %s5, 2048, %s59, [#allocation6], 64, 64, 4
    $region25: #{tpu_custom_call.1} parent=1 // pred_fallthru
      _
    // Predicated region
    $region26: #{tpu_custom_call.1} parent=1 // pred_check
      _
    $region27: #{tpu_custom_call.1} parent=1 // pred_check_branch
      %66 = sbr.rel (0) target = $region29
    $region28: #{tpu_custom_call.1} parent=1 // pred_region
      _
    $region29: #{tpu_custom_call.1} parent=1 // pred_fallthru
      _
    // Predicated region
    $region30: #{tpu_custom_call.1} parent=1 // pred_check
      _
    $region31: #{tpu_custom_call.1} parent=1 // pred_check_branch
      %68 = sbr.rel (0) target = $region33
    $region32: #{tpu_custom_call.1} parent=1 // pred_region
      %s70 = ssub.s32 2048, 2048
      %71 = vsyncadd [#allocation9], %s70
      %s72 = sshll.u32 [#allocation8], 4
      %s73 = int_to_ptr.vmem [resolvable:$true] %s72
      %78 = dma.hbm_to_vmem [thread:$0]  %s7, 2048, %s73, [#allocation9], 64, 64, 4
    $region33: #{tpu_custom_call.1} parent=1 // pred_fallthru
      _
    // Predicated region
    $region34: #{tpu_custom_call.1} parent=1 // pred_check
      _
    $region35: #{tpu_custom_call.1} parent=1 // pred_check_branch
      %80 = sbr.rel (0) target = $region37
    $region36: #{tpu_custom_call.1} parent=1 // pred_region
      _
    $region37: #{tpu_custom_call.1} parent=1 // pred_fallthru
      _
    // Predicated region
    $region38: #{tpu_custom_call.1} parent=1 // pred_check
      _
    $region39: #{tpu_custom_call.1} parent=1 // pred_check_branch
      %82 = sbr.rel (0) target = $region41
    $region40: #{tpu_custom_call.1} parent=1 // pred_region
      %s84 = ssub.s32 2048, 2048
      %85 = vsyncadd [#allocation9], %s84
      %s86 = sshll.u32 [#allocation10], 4
      %s87 = int_to_ptr.vmem [resolvable:$true] %s86
      %92 = dma.hbm_to_vmem [thread:$0]  %s9, 2048, %s87, [#allocation9], 64, 64, 4
    $region41: #{tpu_custom_call.1} parent=1 // pred_fallthru
      _
    // Predicated region
    $region42: #{tpu_custom_call.1} parent=1 // pred_check
      _
    $region43: #{tpu_custom_call.1} parent=1 // pred_check_branch
      %94 = sbr.rel (0) target = $region45
    $region44: #{tpu_custom_call.1} parent=1 // pred_region
      _
    $region45: #{tpu_custom_call.1} parent=1 // pred_fallthru
      _
    // Predicated region
    $region46: #{tpu_custom_call.1} parent=1 // pred_check
      _
    $region47: #{tpu_custom_call.1} parent=1 // pred_check_branch
      %96 = sbr.rel (0) target = $region49
    $region48: #{tpu_custom_call.1} parent=1 // pred_region
      %s98 = ssub.s32 2048, 2048
      %99 = vsyncadd [#allocation12], %s98
      %s100 = sshll.u32 [#allocation11], 4
      %s101 = int_to_ptr.vmem [resolvable:$true] %s100
      %106 = dma.hbm_to_vmem [thread:$0]  %s11, 2048, %s101, [#allocation12], 64, 64, 4
    $region49: #{tpu_custom_call.1} parent=1 // pred_fallthru
      _
    // Predicated region
    $region50: #{tpu_custom_call.1} parent=1 // pred_check
      _
    $region51: #{tpu_custom_call.1} parent=1 // pred_check_branch
      %108 = sbr.rel (0) target = $region53
    $region52: #{tpu_custom_call.1} parent=1 // pred_region
      _
    $region53: #{tpu_custom_call.1} parent=1 // pred_fallthru
      _
    // Predicated region
    $region54: #{tpu_custom_call.1} parent=1 // pred_check
      _
    $region55: #{tpu_custom_call.1} parent=1 // pred_check_branch
      %110 = sbr.rel (0) target = $region57
    $region56: #{tpu_custom_call.1} parent=1 // pred_region
      %111 = dma.done [#allocation3], 1024
    $region57: #{tpu_custom_call.1} parent=1 // pred_fallthru
      _
    // Predicated region
    $region58: #{tpu_custom_call.1} parent=1 // pred_check
      _
    $region59: #{tpu_custom_call.1} parent=1 // pred_check_branch
      %113 = sbr.rel (0) target = $region61
    $region60: #{tpu_custom_call.1} parent=1 // pred_region
      %114 = dma.done [#allocation6], 1024
    $region61: #{tpu_custom_call.1} parent=1 // pred_fallthru
      _
    // Predicated region
    $region62: #{tpu_custom_call.1} parent=1 // pred_check
      _
    $region63: #{tpu_custom_call.1} parent=1 // pred_check_branch
      %116 = sbr.rel (0) target = $region65
    $region64: #{tpu_custom_call.1} parent=1 // pred_region
      %117 = dma.done [#allocation6], 2048
    $region65: #{tpu_custom_call.1} parent=1 // pred_fallthru
      _
    // Predicated region
    $region66: #{tpu_custom_call.1} parent=1 // pred_check
      _
    $region67: #{tpu_custom_call.1} parent=1 // pred_check_branch
      %119 = sbr.rel (0) target = $region69
    $region68: #{tpu_custom_call.1} parent=1 // pred_region
      %120 = dma.done [#allocation9], 2048
    $region69: #{tpu_custom_call.1} parent=1 // pred_fallthru
      _
    // Predicated region
    $region70: #{tpu_custom_call.1} parent=1 // pred_check
      _
    $region71: #{tpu_custom_call.1} parent=1 // pred_check_branch
      %122 = sbr.rel (0) target = $region73
    $region72: #{tpu_custom_call.1} parent=1 // pred_region
      %123 = dma.done [#allocation9], 2048
    $region73: #{tpu_custom_call.1} parent=1 // pred_fallthru
      _
    // Predicated region
    $region74: #{tpu_custom_call.1} parent=1 // pred_check
      _
    $region75: #{tpu_custom_call.1} parent=1 // pred_check_branch
      %125 = sbr.rel (0) target = $region77
    $region76: #{tpu_custom_call.1} parent=1 // pred_region
      %126 = dma.done [#allocation12], 2048
    $region77: #{tpu_custom_call.1} parent=1 // pred_fallthru
      _
    %v128 = vld [vmem:[#allocation2] sm:$0xf]
    %v129 = vld [vmem:[#allocation2 + $0x4] sm:$0xf]
    %v130 = vld [vmem:[#allocation2 + $0x8] sm:$0xf]
    %v131 = vld [vmem:[#allocation2 + $0xc] sm:$0xf]
    %v132 = vld [vmem:[#allocation2 + $0x10] sm:$0xf]
    %v133 = vld [vmem:[#allocation2 + $0x14] sm:$0xf]
    %v134 = vld [vmem:[#allocation2 + $0x18] sm:$0xf]
    %v135 = vld [vmem:[#allocation2 + $0x1c] sm:$0xf]
    %v136 = vld [vmem:[#allocation2 + $0x20] sm:$0xf]
    %v137 = vld [vmem:[#allocation2 + $0x24] sm:$0xf]
    %v138 = vld [vmem:[#allocation2 + $0x28] sm:$0xf]
    %v139 = vld [vmem:[#allocation2 + $0x2c] sm:$0xf]
    %v140 = vld [vmem:[#allocation2 + $0x30] sm:$0xf]
    %v141 = vld [vmem:[#allocation2 + $0x34] sm:$0xf]
    %v142 = vld [vmem:[#allocation2 + $0x38] sm:$0xf]
    %v143 = vld [vmem:[#allocation2 + $0x3c] sm:$0xf]
    %v144 = vld [vmem:[%s1] sm:$0xff]
    %v145 = vld [vmem:[%s1 + $0x8] sm:$0xff]
    %v146 = vld [vmem:[%s1 + $0x10] sm:$0xff]
    %v147 = vld [vmem:[%s1 + $0x18] sm:$0xff]
    %v148 = vld [vmem:[%s1 + $0x20] sm:$0xff]
    %v149 = vld [vmem:[%s1 + $0x28] sm:$0xff]
    %v150 = vld [vmem:[%s1 + $0x30] sm:$0xff]
    %v151 = vld [vmem:[%s1 + $0x38] sm:$0xff]
    %v152 = vld [vmem:[%s1 + $0x40] sm:$0xff]
    %v153 = vld [vmem:[%s1 + $0x48] sm:$0xff]
    %v154 = vld [vmem:[%s1 + $0x50] sm:$0xff]
    %v155 = vld [vmem:[%s1 + $0x58] sm:$0xff]
    %v156 = vld [vmem:[%s1 + $0x60] sm:$0xff]
    %v157 = vld [vmem:[%s1 + $0x68] sm:$0xff]
    %v158 = vld [vmem:[%s1 + $0x70] sm:$0xff]
    %v159 = vld [vmem:[%s1 + $0x78] sm:$0xff]
    %v160 = vld [vmem:[#allocation5] sm:$0xf]
    %v161 = vld [vmem:[#allocation5 + $0x4] sm:$0xf]
    %v162 = vld [vmem:[#allocation5 + $0x8] sm:$0xf]
    %v163 = vld [vmem:[#allocation5 + $0xc] sm:$0xf]
    %v164 = vld [vmem:[#allocation5 + $0x10] sm:$0xf]
    %v165 = vld [vmem:[#allocation5 + $0x14] sm:$0xf]
    %v166 = vld [vmem:[#allocation5 + $0x18] sm:$0xf]
    %v167 = vld [vmem:[#allocation5 + $0x1c] sm:$0xf]
    %v168 = vld [vmem:[#allocation5 + $0x20] sm:$0xf]
    %v169 = vld [vmem:[#allocation5 + $0x24] sm:$0xf]
    %v170 = vld [vmem:[#allocation5 + $0x28] sm:$0xf]
    %v171 = vld [vmem:[#allocation5 + $0x2c] sm:$0xf]
    %v172 = vld [vmem:[#allocation5 + $0x30] sm:$0xf]
    %v173 = vld [vmem:[#allocation5 + $0x34] sm:$0xf]
    %v174 = vld [vmem:[#allocation5 + $0x38] sm:$0xf]
    %v175 = vld [vmem:[#allocation5 + $0x3c] sm:$0xf]
    %v176 = vld [vmem:[%s3] sm:$0xf]
    %v177 = vld [vmem:[%s3 + $0x4] sm:$0xf]
    %v178 = vld [vmem:[%s3 + $0x8] sm:$0xf]
    %v179 = vld [vmem:[%s3 + $0xc] sm:$0xf]
    %v180 = vld [vmem:[%s3 + $0x10] sm:$0xf]
    %v181 = vld [vmem:[%s3 + $0x14] sm:$0xf]
    %v182 = vld [vmem:[%s3 + $0x18] sm:$0xf]
    %v183 = vld [vmem:[%s3 + $0x1c] sm:$0xf]
    %v184 = vld [vmem:[%s3 + $0x20] sm:$0xf]
    %v185 = vld [vmem:[%s3 + $0x24] sm:$0xf]
    %v186 = vld [vmem:[%s3 + $0x28] sm:$0xf]
    %v187 = vld [vmem:[%s3 + $0x2c] sm:$0xf]
    %v188 = vld [vmem:[%s3 + $0x30] sm:$0xf]
    %v189 = vld [vmem:[%s3 + $0x34] sm:$0xf]
    %v190 = vld [vmem:[%s3 + $0x38] sm:$0xf]
    %v191 = vld [vmem:[%s3 + $0x3c] sm:$0xf]
    %v192 = vld [vmem:[%s3 + $0x40] sm:$0xf]
    %v193 = vld [vmem:[%s3 + $0x44] sm:$0xf]
    %v194 = vld [vmem:[%s3 + $0x48] sm:$0xf]
    %v195 = vld [vmem:[%s3 + $0x4c] sm:$0xf]
    %v196 = vld [vmem:[%s3 + $0x50] sm:$0xf]
    %v197 = vld [vmem:[%s3 + $0x54] sm:$0xf]
    %v198 = vld [vmem:[%s3 + $0x58] sm:$0xf]
    %v199 = vld [vmem:[%s3 + $0x5c] sm:$0xf]
    %v200 = vld [vmem:[%s3 + $0x60] sm:$0xf]
    %v201 = vld [vmem:[%s3 + $0x64] sm:$0xf]
    %v202 = vld [vmem:[%s3 + $0x68] sm:$0xf]
    %v203 = vld [vmem:[%s3 + $0x6c] sm:$0xf]
    %v204 = vld [vmem:[%s3 + $0x70] sm:$0xf]
    %v205 = vld [vmem:[%s3 + $0x74] sm:$0xf]
    %v206 = vld [vmem:[%s3 + $0x78] sm:$0xf]
    %v207 = vld [vmem:[%s3 + $0x7c] sm:$0xf]
    %v208 = vld [vmem:[%s4] sm:$0x1]
    %v225 = vunpack.c.l.b16 %v128
    %v226 = vunpack.c.l.b16 %v129
    %v227 = vunpack.c.l.b16 %v130
    %v228 = vunpack.c.l.b16 %v131
    %v229 = vunpack.c.l.b16 %v132
    %v230 = vunpack.c.l.b16 %v133
    %v231 = vunpack.c.l.b16 %v134
    %v232 = vunpack.c.l.b16 %v135
    %v233 = vunpack.c.l.b16 %v136
    %v234 = vunpack.c.l.b16 %v137
    %v235 = vunpack.c.l.b16 %v138
    %v236 = vunpack.c.l.b16 %v139
    %v237 = vunpack.c.l.b16 %v140
    %v238 = vunpack.c.l.b16 %v141
    %v239 = vunpack.c.l.b16 %v142
    %v240 = vunpack.c.l.b16 %v143
    %v241 = vpack.c.b16 %v226, %v225
    %v242 = vpack.c.b16 %v228, %v227
    %v243 = vpack.c.b16 %v230, %v229
    %v244 = vpack.c.b16 %v232, %v231
    %v245 = vpack.c.b16 %v234, %v233
    %v246 = vpack.c.b16 %v236, %v235
    %v247 = vpack.c.b16 %v238, %v237
    %v248 = vpack.c.b16 %v240, %v239
    %v273 = vunpack.c.l.b16 %v160
    %v274 = vunpack.c.l.b16 %v161
    %v275 = vunpack.c.l.b16 %v162
    %v276 = vunpack.c.l.b16 %v163
    %v277 = vunpack.c.l.b16 %v164
    %v278 = vunpack.c.l.b16 %v165
    %v279 = vunpack.c.l.b16 %v166
    %v280 = vunpack.c.l.b16 %v167
    %v281 = vunpack.c.l.b16 %v168
    %v282 = vunpack.c.l.b16 %v169
    %v283 = vunpack.c.l.b16 %v170
    %v284 = vunpack.c.l.b16 %v171
    %v285 = vunpack.c.l.b16 %v172
    %v286 = vunpack.c.l.b16 %v173
    %v287 = vunpack.c.l.b16 %v174
    %v288 = vunpack.c.l.b16 %v175
    %v289 = vpack.c.b16 %v274, %v273
    %v290 = vpack.c.b16 %v276, %v275
    %v291 = vpack.c.b16 %v278, %v277
    %v292 = vpack.c.b16 %v280, %v279
    %v293 = vpack.c.b16 %v282, %v281
    %v294 = vpack.c.b16 %v284, %v283
    %v295 = vpack.c.b16 %v286, %v285
    %v296 = vpack.c.b16 %v288, %v287
    %305 = vmatprep.subr.bf16.mxu0 0
    %306 = vmatpush1.bf16.msra.mxu0 %v296
    %307 = vmatprep.subr.bf16.mxu0 0
    %308 = vmatpush1.bf16.msra.mxu0 %v295
    %309 = vmatprep.subr.bf16.mxu0 0
    %310 = vmatpush1.bf16.msra.mxu0 %v294
    %311 = vmatprep.subr.bf16.mxu0 0
    %312 = vmatpush1.bf16.msra.mxu0 %v293
    %313 = vmatprep.subr.bf16.mxu0 0
    %314 = vmatpush1.bf16.msra.mxu0 %v292
    %315 = vmatprep.subr.bf16.mxu0 0
    %316 = vmatpush1.bf16.msra.mxu0 %v291
    %317 = vmatprep.subr.bf16.mxu0 0
    %318 = vmatpush1.bf16.msra.mxu0 %v290
    %319 = vmatprep.subr.bf16.mxu0 0
    %320 = vmatpush1.bf16.msra.mxu0 %v289
    %321 = vmatprep.subr.bf16.mxu0 0
    %322 = vmatpush2.bf16.msra.mxu0 0
    %323 = vmatprep.subr.bf16.mxu0 0
    %324 = vmatpush2.bf16.msra.mxu0 0
    %325 = vmatprep.subr.bf16.mxu0 0
    %326 = vmatpush2.bf16.msra.mxu0 0
    %327 = vmatprep.subr.bf16.mxu0 0
    %328 = vmatpush2.bf16.msra.mxu0 0
    %329 = vmatprep.subr.bf16.mxu0 0
    %330 = vmatpush2.bf16.msra.mxu0 0
    %331 = vmatprep.subr.bf16.mxu0 0
    %332 = vmatpush2.bf16.msra.mxu0 0
    %333 = vmatprep.subr.bf16.mxu0 0
    %334 = vmatpush2.bf16.msra.mxu0 0
    %335 = vmatprep.subr.bf16.mxu0 0
    %336 = vmatpush2.bf16.msra.mxu0 0
    %337 = vmatprep.mubr.bf16.mxu0 0
    %338 = vmatmul.mubr.bf16.gmra.mxu0 %v241
    %v339 = vpop.f32.mrf.mxu0
    %v340 = vadd.f32 0.0, %v339
    %v341 = vpop.f32.mrf.mxu0
    %v342 = vpop.f32.mrf.mxu0
    %v343 = vadd.f32 0.0, %v342
    %v344 = vpop.f32.mrf.mxu0
    %345 = vmatprep.mubr.bf16.mxu0 0
    %346 = vmatmul.mubr.bf16.gmra.mxu0 %v242
    %v347 = vpop.f32.mrf.mxu0
    %v348 = vadd.f32 0.0, %v347
    %v349 = vpop.f32.mrf.mxu0
    %v350 = vpop.f32.mrf.mxu0
    %v351 = vadd.f32 0.0, %v350
    %v352 = vpop.f32.mrf.mxu0
    %353 = vmatprep.mubr.bf16.mxu0 0
    %354 = vmatmul.mubr.bf16.gmra.mxu0 %v243
    %v355 = vpop.f32.mrf.mxu0
    %v356 = vadd.f32 0.0, %v355
    %v357 = vpop.f32.mrf.mxu0
    %v358 = vpop.f32.mrf.mxu0
    %v359 = vadd.f32 0.0, %v358
    %v360 = vpop.f32.mrf.mxu0
    %361 = vmatprep.mubr.bf16.mxu0 0
    %362 = vmatmul.mubr.bf16.gmra.mxu0 %v244
    %v363 = vpop.f32.mrf.mxu0
    %v364 = vadd.f32 0.0, %v363
    %v365 = vpop.f32.mrf.mxu0
    %v366 = vpop.f32.mrf.mxu0
    %v367 = vadd.f32 0.0, %v366
    %v368 = vpop.f32.mrf.mxu0
    %369 = vmatprep.mubr.bf16.mxu0 0
    %370 = vmatmul.mubr.bf16.gmra.mxu0 %v245
    %v371 = vpop.f32.mrf.mxu0
    %v372 = vadd.f32 0.0, %v371
    %v373 = vpop.f32.mrf.mxu0
    %v374 = vpop.f32.mrf.mxu0
    %v375 = vadd.f32 0.0, %v374
    %v376 = vpop.f32.mrf.mxu0
    %377 = vmatprep.mubr.bf16.mxu0 0
    %378 = vmatmul.mubr.bf16.gmra.mxu0 %v246
    %v379 = vpop.f32.mrf.mxu0
    %v380 = vadd.f32 0.0, %v379
    %v381 = vpop.f32.mrf.mxu0
    %v382 = vpop.f32.mrf.mxu0
    %v383 = vadd.f32 0.0, %v382
    %v384 = vpop.f32.mrf.mxu0
    %385 = vmatprep.mubr.bf16.mxu0 0
    %386 = vmatmul.mubr.bf16.gmra.mxu0 %v247
    %v387 = vpop.f32.mrf.mxu0
    %v388 = vadd.f32 0.0, %v387
    %v389 = vpop.f32.mrf.mxu0
    %v390 = vpop.f32.mrf.mxu0
    %v391 = vadd.f32 0.0, %v390
    %v392 = vpop.f32.mrf.mxu0
    %393 = vmatprep.mubr.bf16.mxu0 0
    %394 = vmatmul.mubr.bf16.gmra.mxu0 %v248
    %v395 = vpop.f32.mrf.mxu0
    %v396 = vadd.f32 0.0, %v395
    %v397 = vpop.f32.mrf.mxu0
    %v398 = vpop.f32.mrf.mxu0
    %v399 = vadd.f32 0.0, %v398
    %v400 = vpop.f32.mrf.mxu0
    %401 = vdwg.mxu0
    %403 = vset.pattern.permute.xlu0 0
    %404 = vperm.xlu0 %403, %v144
    %v405 = vpop.permute.xlu0 %404
    %408 = vset.pattern.permute.xlu0 0
    %409 = vperm.xlu0 %408, %v145
    %v410 = vpop.permute.xlu0 %409
    %413 = vset.pattern.permute.xlu0 0
    %414 = vperm.xlu0 %413, %v146
    %v415 = vpop.permute.xlu0 %414
    %418 = vset.pattern.permute.xlu0 0
    %419 = vperm.xlu0 %418, %v147
    %v420 = vpop.permute.xlu0 %419
    %423 = vset.pattern.permute.xlu0 0
    %424 = vperm.xlu0 %423, %v148
    %v425 = vpop.permute.xlu0 %424
    %428 = vset.pattern.permute.xlu0 0
    %429 = vperm.xlu0 %428, %v149
    %v430 = vpop.permute.xlu0 %429
    %433 = vset.pattern.permute.xlu0 0
    %434 = vperm.xlu0 %433, %v150
    %v435 = vpop.permute.xlu0 %434
    %438 = vset.pattern.permute.xlu0 0
    %439 = vperm.xlu0 %438, %v151
    %v440 = vpop.permute.xlu0 %439
    %443 = vset.pattern.permute.xlu0 0
    %444 = vperm.xlu0 %443, %v152
    %v445 = vpop.permute.xlu0 %444
    %448 = vset.pattern.permute.xlu0 0
    %449 = vperm.xlu0 %448, %v153
    %v450 = vpop.permute.xlu0 %449
    %453 = vset.pattern.permute.xlu0 0
    %454 = vperm.xlu0 %453, %v154
    %v455 = vpop.permute.xlu0 %454
    %458 = vset.pattern.permute.xlu0 0
    %459 = vperm.xlu0 %458, %v155
    %v460 = vpop.permute.xlu0 %459
    %463 = vset.pattern.permute.xlu0 0
    %464 = vperm.xlu0 %463, %v156
    %v465 = vpop.permute.xlu0 %464
    %468 = vset.pattern.permute.xlu0 0
    %469 = vperm.xlu0 %468, %v157
    %v470 = vpop.permute.xlu0 %469
    %473 = vset.pattern.permute.xlu0 0
    %474 = vperm.xlu0 %473, %v158
    %v475 = vpop.permute.xlu0 %474
    %478 = vset.pattern.permute.xlu0 0
    %479 = vperm.xlu0 %478, %v159
    %v480 = vpop.permute.xlu0 %479
    %v482 = vmul.f32 %v340, %v405
    %v483 = vmul.f32 %v343, %v410
    %v484 = vmul.f32 %v348, %v415
    %v485 = vmul.f32 %v351, %v420
    %v486 = vmul.f32 %v356, %v425
    %v487 = vmul.f32 %v359, %v430
    %v488 = vmul.f32 %v364, %v435
    %v489 = vmul.f32 %v367, %v440
    %v490 = vmul.f32 %v372, %v445
    %v491 = vmul.f32 %v375, %v450
    %v492 = vmul.f32 %v380, %v455
    %v493 = vmul.f32 %v383, %v460
    %v494 = vmul.f32 %v388, %v465
    %v495 = vmul.f32 %v391, %v470
    %v496 = vmul.f32 %v396, %v475
    %v497 = vmul.f32 %v399, %v480
    %v498 = vpack.c.bf16 %v483, %v482
    %v499 = vpack.c.bf16 %v485, %v484
    %v500 = vpack.c.bf16 %v487, %v486
    %v501 = vpack.c.bf16 %v489, %v488
    %v502 = vpack.c.bf16 %v491, %v490
    %v503 = vpack.c.bf16 %v493, %v492
    %v504 = vpack.c.bf16 %v495, %v494
    %v505 = vpack.c.bf16 %v497, %v496
    %v507 = vlaneseq
    %v508 = vshrl.u32 %v507, 7
    %v509 = vsub.s32 0, %v508
    %v510 = vrot.slane %v208, %v509
    %v544 = vunpack.c.l.b16 %v176
    %v545 = vunpack.c.l.b16 %v177
    %v546 = vunpack.c.l.b16 %v178
    %v547 = vunpack.c.l.b16 %v179
    %v548 = vunpack.c.l.b16 %v180
    %v549 = vunpack.c.l.b16 %v181
    %v550 = vunpack.c.l.b16 %v182
    %v551 = vunpack.c.l.b16 %v183
    %v552 = vunpack.c.l.b16 %v184
    %v553 = vunpack.c.l.b16 %v185
    %v554 = vunpack.c.l.b16 %v186
    %v555 = vunpack.c.l.b16 %v187
    %v556 = vunpack.c.l.b16 %v188
    %v557 = vunpack.c.l.b16 %v189
    %v558 = vunpack.c.l.b16 %v190
    %v559 = vunpack.c.l.b16 %v191
    %v560 = vunpack.c.l.b16 %v192
    %v561 = vunpack.c.l.b16 %v193
    %v562 = vunpack.c.l.b16 %v194
    %v563 = vunpack.c.l.b16 %v195
    %v564 = vunpack.c.l.b16 %v196
    %v565 = vunpack.c.l.b16 %v197
    %v566 = vunpack.c.l.b16 %v198
    %v567 = vunpack.c.l.b16 %v199
    %v568 = vunpack.c.l.b16 %v200
    %v569 = vunpack.c.l.b16 %v201
    %v570 = vunpack.c.l.b16 %v202
    %v571 = vunpack.c.l.b16 %v203
    %v572 = vunpack.c.l.b16 %v204
    %v573 = vunpack.c.l.b16 %v205
    %v574 = vunpack.c.l.b16 %v206
    %v575 = vunpack.c.l.b16 %v207
    %v576 = vpack.c.b16 %v545, %v544
    %v577 = vpack.c.b16 %v547, %v546
    %v578 = vpack.c.b16 %v549, %v548
    %v579 = vpack.c.b16 %v551, %v550
    %v580 = vpack.c.b16 %v553, %v552
    %v581 = vpack.c.b16 %v555, %v554
    %v582 = vpack.c.b16 %v557, %v556
    %v583 = vpack.c.b16 %v559, %v558
    %v584 = vpack.c.b16 %v561, %v560
    %v585 = vpack.c.b16 %v563, %v562
    %v586 = vpack.c.b16 %v565, %v564
    %v587 = vpack.c.b16 %v567, %v566
    %v588 = vpack.c.b16 %v569, %v568
    %v589 = vpack.c.b16 %v571, %v570
    %v590 = vpack.c.b16 %v573, %v572
    %v591 = vpack.c.b16 %v575, %v574
    %608 = vmatprep.subr.bf16.mxu0 0
    %609 = vmatpush1.bf16.msra.mxu0 %v583
    %610 = vmatprep.subr.bf16.mxu0 0
    %611 = vmatpush1.bf16.msra.mxu0 %v582
    %612 = vmatprep.subr.bf16.mxu0 0
    %613 = vmatpush1.bf16.msra.mxu0 %v581
    %614 = vmatprep.subr.bf16.mxu0 0
    %615 = vmatpush1.bf16.msra.mxu0 %v580
    %616 = vmatprep.subr.bf16.mxu0 0
    %617 = vmatpush1.bf16.msra.mxu0 %v579
    %618 = vmatprep.subr.bf16.mxu0 0
    %619 = vmatpush1.bf16.msra.mxu0 %v578
    %620 = vmatprep.subr.bf16.mxu0 0
    %621 = vmatpush1.bf16.msra.mxu0 %v577
    %622 = vmatprep.subr.bf16.mxu0 0
    %623 = vmatpush1.bf16.msra.mxu0 %v576
    %624 = vmatprep.subr.bf16.mxu0 0
    %625 = vmatpush2.bf16.msra.mxu0 %v591
    %626 = vmatprep.subr.bf16.mxu0 0
    %627 = vmatpush2.bf16.msra.mxu0 %v590
    %628 = vmatprep.subr.bf16.mxu0 0
    %629 = vmatpush2.bf16.msra.mxu0 %v589
    %630 = vmatprep.subr.bf16.mxu0 0
    %631 = vmatpush2.bf16.msra.mxu0 %v588
    %632 = vmatprep.subr.bf16.mxu0 0
    %633 = vmatpush2.bf16.msra.mxu0 %v587
    %634 = vmatprep.subr.bf16.mxu0 0
    %635 = vmatpush2.bf16.msra.mxu0 %v586
    %636 = vmatprep.subr.bf16.mxu0 0
    %637 = vmatpush2.bf16.msra.mxu0 %v585
    %638 = vmatprep.subr.bf16.mxu0 0
    %639 = vmatpush2.bf16.msra.mxu0 %v584
    %640 = vmatprep.mubr.bf16.mxu0 %v289
    %641 = vmatmul.mubr.bf16.gmra.mxu0 %v498
    %v642 = vpop.f32.mrf.mxu0
    %v643 = vadd.f32 %v510, %v642
    %v644 = vpop.f32.mrf.mxu0
    %v645 = vpop.f32.mrf.mxu0
    %v646 = vadd.f32 %v510, %v645
    %v647 = vpop.f32.mrf.mxu0
    %648 = vmatprep.mubr.bf16.mxu0 %v290
    %649 = vmatmul.mubr.bf16.gmra.mxu0 %v499
    %v650 = vpop.f32.mrf.mxu0
    %v651 = vadd.f32 %v510, %v650
    %v652 = vpop.f32.mrf.mxu0
    %v653 = vpop.f32.mrf.mxu0
    %v654 = vadd.f32 %v510, %v653
    %v655 = vpop.f32.mrf.mxu0
    %656 = vmatprep.mubr.bf16.mxu0 %v291
    %657 = vmatmul.mubr.bf16.gmra.mxu0 %v500
    %v658 = vpop.f32.mrf.mxu0
    %v659 = vadd.f32 %v510, %v658
    %v660 = vpop.f32.mrf.mxu0
    %v661 = vpop.f32.mrf.mxu0
    %v662 = vadd.f32 %v510, %v661
    %v663 = vpop.f32.mrf.mxu0
    %664 = vmatprep.mubr.bf16.mxu0 %v292
    %665 = vmatmul.mubr.bf16.gmra.mxu0 %v501
    %v666 = vpop.f32.mrf.mxu0
    %v667 = vadd.f32 %v510, %v666
    %v668 = vpop.f32.mrf.mxu0
    %v669 = vpop.f32.mrf.mxu0
    %v670 = vadd.f32 %v510, %v669
    %v671 = vpop.f32.mrf.mxu0
    %672 = vmatprep.mubr.bf16.mxu0 %v293
    %673 = vmatmul.mubr.bf16.gmra.mxu0 %v502
    %v674 = vpop.f32.mrf.mxu0
    %v675 = vadd.f32 %v510, %v674
    %v676 = vpop.f32.mrf.mxu0
    %v677 = vpop.f32.mrf.mxu0
    %v678 = vadd.f32 %v510, %v677
    %v679 = vpop.f32.mrf.mxu0
    %680 = vmatprep.mubr.bf16.mxu0 %v294
    %681 = vmatmul.mubr.bf16.gmra.mxu0 %v503
    %v682 = vpop.f32.mrf.mxu0
    %v683 = vadd.f32 %v510, %v682
    %v684 = vpop.f32.mrf.mxu0
    %v685 = vpop.f32.mrf.mxu0
    %v686 = vadd.f32 %v510, %v685
    %v687 = vpop.f32.mrf.mxu0
    %688 = vmatprep.mubr.bf16.mxu0 %v295
    %689 = vmatmul.mubr.bf16.gmra.mxu0 %v504
    %v690 = vpop.f32.mrf.mxu0
    %v691 = vadd.f32 %v510, %v690
    %v692 = vpop.f32.mrf.mxu0
    %v693 = vpop.f32.mrf.mxu0
    %v694 = vadd.f32 %v510, %v693
    %v695 = vpop.f32.mrf.mxu0
    %696 = vmatprep.mubr.bf16.mxu0 %v296
    %697 = vmatmul.mubr.bf16.gmra.mxu0 %v505
    %v698 = vpop.f32.mrf.mxu0
    %v699 = vadd.f32 %v510, %v698
    %v700 = vpop.f32.mrf.mxu0
    %v701 = vpop.f32.mrf.mxu0
    %v702 = vadd.f32 %v510, %v701
    %v703 = vpop.f32.mrf.mxu0
    %704 = vdwg.mxu0
    %v705 = vmax.f32 %v643, 0.0
    %v706 = vmax.f32 %v646, 0.0
    %v707 = vmax.f32 %v651, 0.0
    %v708 = vmax.f32 %v654, 0.0
    %v709 = vmax.f32 %v659, 0.0
    %v710 = vmax.f32 %v662, 0.0
    %v711 = vmax.f32 %v667, 0.0
    %v712 = vmax.f32 %v670, 0.0
    %v713 = vmax.f32 %v675, 0.0
    %v714 = vmax.f32 %v678, 0.0
    %v715 = vmax.f32 %v683, 0.0
    %v716 = vmax.f32 %v686, 0.0
    %v717 = vmax.f32 %v691, 0.0
    %v718 = vmax.f32 %v694, 0.0
    %v719 = vmax.f32 %v699, 0.0
    %v720 = vmax.f32 %v702, 0.0
    %v721 = vpack.c.bf16 %v706, %v705
    %v722 = vpack.c.bf16 %v708, %v707
    %v723 = vpack.c.bf16 %v710, %v709
    %v724 = vpack.c.bf16 %v712, %v711
    %v725 = vpack.c.bf16 %v714, %v713
    %v726 = vpack.c.bf16 %v716, %v715
    %v727 = vpack.c.bf16 %v718, %v717
    %v728 = vpack.c.bf16 %v720, %v719
    %v729 = vld [vmem:[#allocation7] sm:$0xf]
    %v730 = vld [vmem:[#allocation7 + $0x4] sm:$0xf]
    %v731 = vld [vmem:[#allocation7 + $0x8] sm:$0xf]
    %v732 = vld [vmem:[#allocation7 + $0xc] sm:$0xf]
    %v733 = vld [vmem:[#allocation7 + $0x10] sm:$0xf]
    %v734 = vld [vmem:[#allocation7 + $0x14] sm:$0xf]
    %v735 = vld [vmem:[#allocation7 + $0x18] sm:$0xf]
    %v736 = vld [vmem:[#allocation7 + $0x1c] sm:$0xf]
    %v737 = vld [vmem:[#allocation7 + $0x20] sm:$0xf]
    %v738 = vld [vmem:[#allocation7 + $0x24] sm:$0xf]
    %v739 = vld [vmem:[#allocation7 + $0x28] sm:$0xf]
    %v740 = vld [vmem:[#allocation7 + $0x2c] sm:$0xf]
    %v741 = vld [vmem:[#allocation7 + $0x30] sm:$0xf]
    %v742 = vld [vmem:[#allocation7 + $0x34] sm:$0xf]
    %v743 = vld [vmem:[#allocation7 + $0x38] sm:$0xf]
    %v744 = vld [vmem:[#allocation7 + $0x3c] sm:$0xf]
    %v745 = vld [vmem:[#allocation7 + $0x40] sm:$0xf]
    %v746 = vld [vmem:[#allocation7 + $0x44] sm:$0xf]
    %v747 = vld [vmem:[#allocation7 + $0x48] sm:$0xf]
    %v748 = vld [vmem:[#allocation7 + $0x4c] sm:$0xf]
    %v749 = vld [vmem:[#allocation7 + $0x50] sm:$0xf]
    %v750 = vld [vmem:[#allocation7 + $0x54] sm:$0xf]
    %v751 = vld [vmem:[#allocation7 + $0x58] sm:$0xf]
    %v752 = vld [vmem:[#allocation7 + $0x5c] sm:$0xf]
    %v753 = vld [vmem:[#allocation7 + $0x60] sm:$0xf]
    %v754 = vld [vmem:[#allocation7 + $0x64] sm:$0xf]
    %v755 = vld [vmem:[#allocation7 + $0x68] sm:$0xf]
    %v756 = vld [vmem:[#allocation7 + $0x6c] sm:$0xf]
    %v757 = vld [vmem:[#allocation7 + $0x70] sm:$0xf]
    %v758 = vld [vmem:[#allocation7 + $0x74] sm:$0xf]
    %v759 = vld [vmem:[#allocation7 + $0x78] sm:$0xf]
    %v760 = vld [vmem:[#allocation7 + $0x7c] sm:$0xf]
    %v761 = vld [vmem:[%s6] sm:$0x1]
    %762 = vmatprep.subr.bf16.mxu0 0
    %763 = vmatpush1.bf16.msra.mxu0 %v728
    %764 = vmatprep.subr.bf16.mxu0 0
    %765 = vmatpush1.bf16.msra.mxu0 %v727
    %766 = vmatprep.subr.bf16.mxu0 0
    %767 = vmatpush1.bf16.msra.mxu0 %v726
    %768 = vmatprep.subr.bf16.mxu0 0
    %769 = vmatpush1.bf16.msra.mxu0 %v725
    %770 = vmatprep.subr.bf16.mxu0 0
    %771 = vmatpush1.bf16.msra.mxu0 %v724
    %772 = vmatprep.subr.bf16.mxu0 0
    %773 = vmatpush1.bf16.msra.mxu0 %v723
    %774 = vmatprep.subr.bf16.mxu0 0
    %775 = vmatpush1.bf16.msra.mxu0 %v722
    %776 = vmatprep.subr.bf16.mxu0 0
    %777 = vmatpush1.bf16.msra.mxu0 %v721
    %778 = vmatprep.subr.bf16.mxu0 0
    %779 = vmatpush2.bf16.msra.mxu0 0
    %780 = vmatprep.subr.bf16.mxu0 0
    %781 = vmatpush2.bf16.msra.mxu0 0
    %782 = vmatprep.subr.bf16.mxu0 0
    %783 = vmatpush2.bf16.msra.mxu0 0
    %784 = vmatprep.subr.bf16.mxu0 0
    %785 = vmatpush2.bf16.msra.mxu0 0
    %786 = vmatprep.subr.bf16.mxu0 0
    %787 = vmatpush2.bf16.msra.mxu0 0
    %788 = vmatprep.subr.bf16.mxu0 0
    %789 = vmatpush2.bf16.msra.mxu0 0
    %790 = vmatprep.subr.bf16.mxu0 0
    %791 = vmatpush2.bf16.msra.mxu0 0
    %792 = vmatprep.subr.bf16.mxu0 0
    %793 = vmatpush2.bf16.msra.mxu0 0
    %794 = vmatprep.mubr.bf16.mxu0 0
    %795 = vmatmul.mubr.bf16.gmra.mxu0 %v241
    %v796 = vpop.f32.mrf.mxu0
    %v797 = vadd.f32 0.0, %v796
    %v798 = vpop.f32.mrf.mxu0
    %v799 = vpop.f32.mrf.mxu0
    %v800 = vadd.f32 0.0, %v799
    %v801 = vpop.f32.mrf.mxu0
    %802 = vmatprep.mubr.bf16.mxu0 0
    %803 = vmatmul.mubr.bf16.gmra.mxu0 %v242
    %v804 = vpop.f32.mrf.mxu0
    %v805 = vadd.f32 0.0, %v804
    %v806 = vpop.f32.mrf.mxu0
    %v807 = vpop.f32.mrf.mxu0
    %v808 = vadd.f32 0.0, %v807
    %v809 = vpop.f32.mrf.mxu0
    %810 = vmatprep.mubr.bf16.mxu0 0
    %811 = vmatmul.mubr.bf16.gmra.mxu0 %v243
    %v812 = vpop.f32.mrf.mxu0
    %v813 = vadd.f32 0.0, %v812
    %v814 = vpop.f32.mrf.mxu0
    %v815 = vpop.f32.mrf.mxu0
    %v816 = vadd.f32 0.0, %v815
    %v817 = vpop.f32.mrf.mxu0
    %818 = vmatprep.mubr.bf16.mxu0 0
    %819 = vmatmul.mubr.bf16.gmra.mxu0 %v244
    %v820 = vpop.f32.mrf.mxu0
    %v821 = vadd.f32 0.0, %v820
    %v822 = vpop.f32.mrf.mxu0
    %v823 = vpop.f32.mrf.mxu0
    %v824 = vadd.f32 0.0, %v823
    %v825 = vpop.f32.mrf.mxu0
    %826 = vmatprep.mubr.bf16.mxu0 0
    %827 = vmatmul.mubr.bf16.gmra.mxu0 %v245
    %v828 = vpop.f32.mrf.mxu0
    %v829 = vadd.f32 0.0, %v828
    %v830 = vpop.f32.mrf.mxu0
    %v831 = vpop.f32.mrf.mxu0
    %v832 = vadd.f32 0.0, %v831
    %v833 = vpop.f32.mrf.mxu0
    %834 = vmatprep.mubr.bf16.mxu0 0
    %835 = vmatmul.mubr.bf16.gmra.mxu0 %v246
    %v836 = vpop.f32.mrf.mxu0
    %v837 = vadd.f32 0.0, %v836
    %v838 = vpop.f32.mrf.mxu0
    %v839 = vpop.f32.mrf.mxu0
    %v840 = vadd.f32 0.0, %v839
    %v841 = vpop.f32.mrf.mxu0
    %842 = vmatprep.mubr.bf16.mxu0 0
    %843 = vmatmul.mubr.bf16.gmra.mxu0 %v247
    %v844 = vpop.f32.mrf.mxu0
    %v845 = vadd.f32 0.0, %v844
    %v846 = vpop.f32.mrf.mxu0
    %v847 = vpop.f32.mrf.mxu0
    %v848 = vadd.f32 0.0, %v847
    %v849 = vpop.f32.mrf.mxu0
    %850 = vmatprep.mubr.bf16.mxu0 0
    %851 = vmatmul.mubr.bf16.gmra.mxu0 %v248
    %v852 = vpop.f32.mrf.mxu0
    %v853 = vadd.f32 0.0, %v852
    %v854 = vpop.f32.mrf.mxu0
    %v855 = vpop.f32.mrf.mxu0
    %v856 = vadd.f32 0.0, %v855
    %v857 = vpop.f32.mrf.mxu0
    %858 = vdwg.mxu0
    %v859 = vmul.f32 %v797, %v405
    %v860 = vmul.f32 %v800, %v410
    %v861 = vmul.f32 %v805, %v415
    %v862 = vmul.f32 %v808, %v420
    %v863 = vmul.f32 %v813, %v425
    %v864 = vmul.f32 %v816, %v430
    %v865 = vmul.f32 %v821, %v435
    %v866 = vmul.f32 %v824, %v440
    %v867 = vmul.f32 %v829, %v445
    %v868 = vmul.f32 %v832, %v450
    %v869 = vmul.f32 %v837, %v455
    %v870 = vmul.f32 %v840, %v460
    %v871 = vmul.f32 %v845, %v465
    %v872 = vmul.f32 %v848, %v470
    %v873 = vmul.f32 %v853, %v475
    %v874 = vmul.f32 %v856, %v480
    %v875 = vpack.c.bf16 %v860, %v859
    %v876 = vpack.c.bf16 %v862, %v861
    %v877 = vpack.c.bf16 %v864, %v863
    %v878 = vpack.c.bf16 %v866, %v865
    %v879 = vpack.c.bf16 %v868, %v867
    %v880 = vpack.c.bf16 %v870, %v869
    %v881 = vpack.c.bf16 %v872, %v871
    %v882 = vpack.c.bf16 %v874, %v873
    %v884 = vlaneseq
    %v885 = vshrl.u32 %v884, 7
    %v886 = vsub.s32 0, %v885
    %v887 = vrot.slane %v761, %v886
    %v921 = vunpack.c.l.b16 %v729
    %v922 = vunpack.c.l.b16 %v730
    %v923 = vunpack.c.l.b16 %v731
    %v924 = vunpack.c.l.b16 %v732
    %v925 = vunpack.c.l.b16 %v733
    %v926 = vunpack.c.l.b16 %v734
    %v927 = vunpack.c.l.b16 %v735
    %v928 = vunpack.c.l.b16 %v736
    %v929 = vunpack.c.l.b16 %v737
    %v930 = vunpack.c.l.b16 %v738
    %v931 = vunpack.c.l.b16 %v739
    %v932 = vunpack.c.l.b16 %v740
    %v933 = vunpack.c.l.b16 %v741
    %v934 = vunpack.c.l.b16 %v742
    %v935 = vunpack.c.l.b16 %v743
    %v936 = vunpack.c.l.b16 %v744
    %v937 = vunpack.c.l.b16 %v745
    %v938 = vunpack.c.l.b16 %v746
    %v939 = vunpack.c.l.b16 %v747
    %v940 = vunpack.c.l.b16 %v748
    %v941 = vunpack.c.l.b16 %v749
    %v942 = vunpack.c.l.b16 %v750
    %v943 = vunpack.c.l.b16 %v751
    %v944 = vunpack.c.l.b16 %v752
    %v945 = vunpack.c.l.b16 %v753
    %v946 = vunpack.c.l.b16 %v754
    %v947 = vunpack.c.l.b16 %v755
    %v948 = vunpack.c.l.b16 %v756
    %v949 = vunpack.c.l.b16 %v757
    %v950 = vunpack.c.l.b16 %v758
    %v951 = vunpack.c.l.b16 %v759
    %v952 = vunpack.c.l.b16 %v760
    %v953 = vpack.c.b16 %v922, %v921
    %v954 = vpack.c.b16 %v924, %v923
    %v955 = vpack.c.b16 %v926, %v925
    %v956 = vpack.c.b16 %v928, %v927
    %v957 = vpack.c.b16 %v930, %v929
    %v958 = vpack.c.b16 %v932, %v931
    %v959 = vpack.c.b16 %v934, %v933
    %v960 = vpack.c.b16 %v936, %v935
    %v961 = vpack.c.b16 %v938, %v937
    %v962 = vpack.c.b16 %v940, %v939
    %v963 = vpack.c.b16 %v942, %v941
    %v964 = vpack.c.b16 %v944, %v943
    %v965 = vpack.c.b16 %v946, %v945
    %v966 = vpack.c.b16 %v948, %v947
    %v967 = vpack.c.b16 %v950, %v949
    %v968 = vpack.c.b16 %v952, %v951
    %985 = vmatprep.subr.bf16.mxu0 0
    %986 = vmatpush1.bf16.msra.mxu0 %v960
    %987 = vmatprep.subr.bf16.mxu0 0
    %988 = vmatpush1.bf16.msra.mxu0 %v959
    %989 = vmatprep.subr.bf16.mxu0 0
    %990 = vmatpush1.bf16.msra.mxu0 %v958
    %991 = vmatprep.subr.bf16.mxu0 0
    %992 = vmatpush1.bf16.msra.mxu0 %v957
    %993 = vmatprep.subr.bf16.mxu0 0
    %994 = vmatpush1.bf16.msra.mxu0 %v956
    %995 = vmatprep.subr.bf16.mxu0 0
    %996 = vmatpush1.bf16.msra.mxu0 %v955
    %997 = vmatprep.subr.bf16.mxu0 0
    %998 = vmatpush1.bf16.msra.mxu0 %v954
    %999 = vmatprep.subr.bf16.mxu0 0
    %1000 = vmatpush1.bf16.msra.mxu0 %v953
    %1001 = vmatprep.subr.bf16.mxu0 0
    %1002 = vmatpush2.bf16.msra.mxu0 %v968
    %1003 = vmatprep.subr.bf16.mxu0 0
    %1004 = vmatpush2.bf16.msra.mxu0 %v967
    %1005 = vmatprep.subr.bf16.mxu0 0
    %1006 = vmatpush2.bf16.msra.mxu0 %v966
    %1007 = vmatprep.subr.bf16.mxu0 0
    %1008 = vmatpush2.bf16.msra.mxu0 %v965
    %1009 = vmatprep.subr.bf16.mxu0 0
    %1010 = vmatpush2.bf16.msra.mxu0 %v964
    %1011 = vmatprep.subr.bf16.mxu0 0
    %1012 = vmatpush2.bf16.msra.mxu0 %v963
    %1013 = vmatprep.subr.bf16.mxu0 0
    %1014 = vmatpush2.bf16.msra.mxu0 %v962
    %1015 = vmatprep.subr.bf16.mxu0 0
    %1016 = vmatpush2.bf16.msra.mxu0 %v961
    %1017 = vmatprep.mubr.bf16.mxu0 %v721
    %1018 = vmatmul.mubr.bf16.gmra.mxu0 %v875
    %v1019 = vpop.f32.mrf.mxu0
    %v1020 = vadd.f32 %v887, %v1019
    %v1021 = vpop.f32.mrf.mxu0
    %v1022 = vpop.f32.mrf.mxu0
    %v1023 = vadd.f32 %v887, %v1022
    %v1024 = vpop.f32.mrf.mxu0
    %1025 = vmatprep.mubr.bf16.mxu0 %v722
    %1026 = vmatmul.mubr.bf16.gmra.mxu0 %v876
    %v1027 = vpop.f32.mrf.mxu0
    %v1028 = vadd.f32 %v887, %v1027
    %v1029 = vpop.f32.mrf.mxu0
    %v1030 = vpop.f32.mrf.mxu0
    %v1031 = vadd.f32 %v887, %v1030
    %v1032 = vpop.f32.mrf.mxu0
    %1033 = vmatprep.mubr.bf16.mxu0 %v723
    %1034 = vmatmul.mubr.bf16.gmra.mxu0 %v877
    %v1035 = vpop.f32.mrf.mxu0
    %v1036 = vadd.f32 %v887, %v1035
    %v1037 = vpop.f32.mrf.mxu0
    %v1038 = vpop.f32.mrf.mxu0
    %v1039 = vadd.f32 %v887, %v1038
    %v1040 = vpop.f32.mrf.mxu0
    %1041 = vmatprep.mubr.bf16.mxu0 %v724
    %1042 = vmatmul.mubr.bf16.gmra.mxu0 %v878
    %v1043 = vpop.f32.mrf.mxu0
    %v1044 = vadd.f32 %v887, %v1043
    %v1045 = vpop.f32.mrf.mxu0
    %v1046 = vpop.f32.mrf.mxu0
    %v1047 = vadd.f32 %v887, %v1046
    %v1048 = vpop.f32.mrf.mxu0
    %1049 = vmatprep.mubr.bf16.mxu0 %v725
    %1050 = vmatmul.mubr.bf16.gmra.mxu0 %v879
    %v1051 = vpop.f32.mrf.mxu0
    %v1052 = vadd.f32 %v887, %v1051
    %v1053 = vpop.f32.mrf.mxu0
    %v1054 = vpop.f32.mrf.mxu0
    %v1055 = vadd.f32 %v887, %v1054
    %v1056 = vpop.f32.mrf.mxu0
    %1057 = vmatprep.mubr.bf16.mxu0 %v726
    %1058 = vmatmul.mubr.bf16.gmra.mxu0 %v880
    %v1059 = vpop.f32.mrf.mxu0
    %v1060 = vadd.f32 %v887, %v1059
    %v1061 = vpop.f32.mrf.mxu0
    %v1062 = vpop.f32.mrf.mxu0
    %v1063 = vadd.f32 %v887, %v1062
    %v1064 = vpop.f32.mrf.mxu0
    %1065 = vmatprep.mubr.bf16.mxu0 %v727
    %1066 = vmatmul.mubr.bf16.gmra.mxu0 %v881
    %v1067 = vpop.f32.mrf.mxu0
    %v1068 = vadd.f32 %v887, %v1067
    %v1069 = vpop.f32.mrf.mxu0
    %v1070 = vpop.f32.mrf.mxu0
    %v1071 = vadd.f32 %v887, %v1070
    %v1072 = vpop.f32.mrf.mxu0
    %1073 = vmatprep.mubr.bf16.mxu0 %v728
    %1074 = vmatmul.mubr.bf16.gmra.mxu0 %v882
    %v1075 = vpop.f32.mrf.mxu0
    %v1076 = vadd.f32 %v887, %v1075
    %v1077 = vpop.f32.mrf.mxu0
    %v1078 = vpop.f32.mrf.mxu0
    %v1079 = vadd.f32 %v887, %v1078
    %v1080 = vpop.f32.mrf.mxu0
    %1081 = vdwg.mxu0
    %v1082 = vmax.f32 %v1020, 0.0
    %v1083 = vmax.f32 %v1023, 0.0
    %v1084 = vmax.f32 %v1028, 0.0
    %v1085 = vmax.f32 %v1031, 0.0
    %v1086 = vmax.f32 %v1036, 0.0
    %v1087 = vmax.f32 %v1039, 0.0
    %v1088 = vmax.f32 %v1044, 0.0
    %v1089 = vmax.f32 %v1047, 0.0
    %v1090 = vmax.f32 %v1052, 0.0
    %v1091 = vmax.f32 %v1055, 0.0
    %v1092 = vmax.f32 %v1060, 0.0
    %v1093 = vmax.f32 %v1063, 0.0
    %v1094 = vmax.f32 %v1068, 0.0
    %v1095 = vmax.f32 %v1071, 0.0
    %v1096 = vmax.f32 %v1076, 0.0
    %v1097 = vmax.f32 %v1079, 0.0
    %v1098 = vpack.c.bf16 %v1083, %v1082
    %v1099 = vpack.c.bf16 %v1085, %v1084
    %v1100 = vpack.c.bf16 %v1087, %v1086
    %v1101 = vpack.c.bf16 %v1089, %v1088
    %v1102 = vpack.c.bf16 %v1091, %v1090
    %v1103 = vpack.c.bf16 %v1093, %v1092
    %v1104 = vpack.c.bf16 %v1095, %v1094
    %v1105 = vpack.c.bf16 %v1097, %v1096
    %v1106 = vld [vmem:[#allocation8] sm:$0xf]
    %v1107 = vld [vmem:[#allocation8 + $0x4] sm:$0xf]
    %v1108 = vld [vmem:[#allocation8 + $0x8] sm:$0xf]
    %v1109 = vld [vmem:[#allocation8 + $0xc] sm:$0xf]
    %v1110 = vld [vmem:[#allocation8 + $0x10] sm:$0xf]
    %v1111 = vld [vmem:[#allocation8 + $0x14] sm:$0xf]
    %v1112 = vld [vmem:[#allocation8 + $0x18] sm:$0xf]
    %v1113 = vld [vmem:[#allocation8 + $0x1c] sm:$0xf]
    %v1114 = vld [vmem:[#allocation8 + $0x20] sm:$0xf]
    %v1115 = vld [vmem:[#allocation8 + $0x24] sm:$0xf]
    %v1116 = vld [vmem:[#allocation8 + $0x28] sm:$0xf]
    %v1117 = vld [vmem:[#allocation8 + $0x2c] sm:$0xf]
    %v1118 = vld [vmem:[#allocation8 + $0x30] sm:$0xf]
    %v1119 = vld [vmem:[#allocation8 + $0x34] sm:$0xf]
    %v1120 = vld [vmem:[#allocation8 + $0x38] sm:$0xf]
    %v1121 = vld [vmem:[#allocation8 + $0x3c] sm:$0xf]
    %v1122 = vld [vmem:[#allocation8 + $0x40] sm:$0xf]
    %v1123 = vld [vmem:[#allocation8 + $0x44] sm:$0xf]
    %v1124 = vld [vmem:[#allocation8 + $0x48] sm:$0xf]
    %v1125 = vld [vmem:[#allocation8 + $0x4c] sm:$0xf]
    %v1126 = vld [vmem:[#allocation8 + $0x50] sm:$0xf]
    %v1127 = vld [vmem:[#allocation8 + $0x54] sm:$0xf]
    %v1128 = vld [vmem:[#allocation8 + $0x58] sm:$0xf]
    %v1129 = vld [vmem:[#allocation8 + $0x5c] sm:$0xf]
    %v1130 = vld [vmem:[#allocation8 + $0x60] sm:$0xf]
    %v1131 = vld [vmem:[#allocation8 + $0x64] sm:$0xf]
    %v1132 = vld [vmem:[#allocation8 + $0x68] sm:$0xf]
    %v1133 = vld [vmem:[#allocation8 + $0x6c] sm:$0xf]
    %v1134 = vld [vmem:[#allocation8 + $0x70] sm:$0xf]
    %v1135 = vld [vmem:[#allocation8 + $0x74] sm:$0xf]
    %v1136 = vld [vmem:[#allocation8 + $0x78] sm:$0xf]
    %v1137 = vld [vmem:[#allocation8 + $0x7c] sm:$0xf]
    %v1138 = vld [vmem:[%s8] sm:$0x1]
    %1139 = vmatprep.subr.bf16.mxu0 0
    %1140 = vmatpush1.bf16.msra.mxu0 %v1105
    %1141 = vmatprep.subr.bf16.mxu0 0
    %1142 = vmatpush1.bf16.msra.mxu0 %v1104
    %1143 = vmatprep.subr.bf16.mxu0 0
    %1144 = vmatpush1.bf16.msra.mxu0 %v1103
    %1145 = vmatprep.subr.bf16.mxu0 0
    %1146 = vmatpush1.bf16.msra.mxu0 %v1102
    %1147 = vmatprep.subr.bf16.mxu0 0
    %1148 = vmatpush1.bf16.msra.mxu0 %v1101
    %1149 = vmatprep.subr.bf16.mxu0 0
    %1150 = vmatpush1.bf16.msra.mxu0 %v1100
    %1151 = vmatprep.subr.bf16.mxu0 0
    %1152 = vmatpush1.bf16.msra.mxu0 %v1099
    %1153 = vmatprep.subr.bf16.mxu0 0
    %1154 = vmatpush1.bf16.msra.mxu0 %v1098
    %1155 = vmatprep.subr.bf16.mxu0 0
    %1156 = vmatpush2.bf16.msra.mxu0 0
    %1157 = vmatprep.subr.bf16.mxu0 0
    %1158 = vmatpush2.bf16.msra.mxu0 0
    %1159 = vmatprep.subr.bf16.mxu0 0
    %1160 = vmatpush2.bf16.msra.mxu0 0
    %1161 = vmatprep.subr.bf16.mxu0 0
    %1162 = vmatpush2.bf16.msra.mxu0 0
    %1163 = vmatprep.subr.bf16.mxu0 0
    %1164 = vmatpush2.bf16.msra.mxu0 0
    %1165 = vmatprep.subr.bf16.mxu0 0
    %1166 = vmatpush2.bf16.msra.mxu0 0
    %1167 = vmatprep.subr.bf16.mxu0 0
    %1168 = vmatpush2.bf16.msra.mxu0 0
    %1169 = vmatprep.subr.bf16.mxu0 0
    %1170 = vmatpush2.bf16.msra.mxu0 0
    %1171 = vmatprep.mubr.bf16.mxu0 0
    %1172 = vmatmul.mubr.bf16.gmra.mxu0 %v241
    %v1173 = vpop.f32.mrf.mxu0
    %v1174 = vadd.f32 0.0, %v1173
    %v1175 = vpop.f32.mrf.mxu0
    %v1176 = vpop.f32.mrf.mxu0
    %v1177 = vadd.f32 0.0, %v1176
    %v1178 = vpop.f32.mrf.mxu0
    %1179 = vmatprep.mubr.bf16.mxu0 0
    %1180 = vmatmul.mubr.bf16.gmra.mxu0 %v242
    %v1181 = vpop.f32.mrf.mxu0
    %v1182 = vadd.f32 0.0, %v1181
    %v1183 = vpop.f32.mrf.mxu0
    %v1184 = vpop.f32.mrf.mxu0
    %v1185 = vadd.f32 0.0, %v1184
    %v1186 = vpop.f32.mrf.mxu0
    %1187 = vmatprep.mubr.bf16.mxu0 0
    %1188 = vmatmul.mubr.bf16.gmra.mxu0 %v243
    %v1189 = vpop.f32.mrf.mxu0
    %v1190 = vadd.f32 0.0, %v1189
    %v1191 = vpop.f32.mrf.mxu0
    %v1192 = vpop.f32.mrf.mxu0
    %v1193 = vadd.f32 0.0, %v1192
    %v1194 = vpop.f32.mrf.mxu0
    %1195 = vmatprep.mubr.bf16.mxu0 0
    %1196 = vmatmul.mubr.bf16.gmra.mxu0 %v244
    %v1197 = vpop.f32.mrf.mxu0
    %v1198 = vadd.f32 0.0, %v1197
    %v1199 = vpop.f32.mrf.mxu0
    %v1200 = vpop.f32.mrf.mxu0
    %v1201 = vadd.f32 0.0, %v1200
    %v1202 = vpop.f32.mrf.mxu0
    %1203 = vmatprep.mubr.bf16.mxu0 0
    %1204 = vmatmul.mubr.bf16.gmra.mxu0 %v245
    %v1205 = vpop.f32.mrf.mxu0
    %v1206 = vadd.f32 0.0, %v1205
    %v1207 = vpop.f32.mrf.mxu0
    %v1208 = vpop.f32.mrf.mxu0
    %v1209 = vadd.f32 0.0, %v1208
    %v1210 = vpop.f32.mrf.mxu0
    %1211 = vmatprep.mubr.bf16.mxu0 0
    %1212 = vmatmul.mubr.bf16.gmra.mxu0 %v246
    %v1213 = vpop.f32.mrf.mxu0
    %v1214 = vadd.f32 0.0, %v1213
    %v1215 = vpop.f32.mrf.mxu0
    %v1216 = vpop.f32.mrf.mxu0
    %v1217 = vadd.f32 0.0, %v1216
    %v1218 = vpop.f32.mrf.mxu0
    %1219 = vmatprep.mubr.bf16.mxu0 0
    %1220 = vmatmul.mubr.bf16.gmra.mxu0 %v247
    %v1221 = vpop.f32.mrf.mxu0
    %v1222 = vadd.f32 0.0, %v1221
    %v1223 = vpop.f32.mrf.mxu0
    %v1224 = vpop.f32.mrf.mxu0
    %v1225 = vadd.f32 0.0, %v1224
    %v1226 = vpop.f32.mrf.mxu0
    %1227 = vmatprep.mubr.bf16.mxu0 0
    %1228 = vmatmul.mubr.bf16.gmra.mxu0 %v248
    %v1229 = vpop.f32.mrf.mxu0
    %v1230 = vadd.f32 0.0, %v1229
    %v1231 = vpop.f32.mrf.mxu0
    %v1232 = vpop.f32.mrf.mxu0
    %v1233 = vadd.f32 0.0, %v1232
    %v1234 = vpop.f32.mrf.mxu0
    %1235 = vdwg.mxu0
    %v1236 = vmul.f32 %v1174, %v405
    %v1237 = vmul.f32 %v1177, %v410
    %v1238 = vmul.f32 %v1182, %v415
    %v1239 = vmul.f32 %v1185, %v420
    %v1240 = vmul.f32 %v1190, %v425
    %v1241 = vmul.f32 %v1193, %v430
    %v1242 = vmul.f32 %v1198, %v435
    %v1243 = vmul.f32 %v1201, %v440
    %v1244 = vmul.f32 %v1206, %v445
    %v1245 = vmul.f32 %v1209, %v450
    %v1246 = vmul.f32 %v1214, %v455
    %v1247 = vmul.f32 %v1217, %v460
    %v1248 = vmul.f32 %v1222, %v465
    %v1249 = vmul.f32 %v1225, %v470
    %v1250 = vmul.f32 %v1230, %v475
    %v1251 = vmul.f32 %v1233, %v480
    %v1252 = vpack.c.bf16 %v1237, %v1236
    %v1253 = vpack.c.bf16 %v1239, %v1238
    %v1254 = vpack.c.bf16 %v1241, %v1240
    %v1255 = vpack.c.bf16 %v1243, %v1242
    %v1256 = vpack.c.bf16 %v1245, %v1244
    %v1257 = vpack.c.bf16 %v1247, %v1246
    %v1258 = vpack.c.bf16 %v1249, %v1248
    %v1259 = vpack.c.bf16 %v1251, %v1250
    %v1261 = vlaneseq
    %v1262 = vshrl.u32 %v1261, 7
    %v1263 = vsub.s32 0, %v1262
    %v1264 = vrot.slane %v1138, %v1263
    %v1298 = vunpack.c.l.b16 %v1106
    %v1299 = vunpack.c.l.b16 %v1107
    %v1300 = vunpack.c.l.b16 %v1108
    %v1301 = vunpack.c.l.b16 %v1109
    %v1302 = vunpack.c.l.b16 %v1110
    %v1303 = vunpack.c.l.b16 %v1111
    %v1304 = vunpack.c.l.b16 %v1112
    %v1305 = vunpack.c.l.b16 %v1113
    %v1306 = vunpack.c.l.b16 %v1114
    %v1307 = vunpack.c.l.b16 %v1115
    %v1308 = vunpack.c.l.b16 %v1116
    %v1309 = vunpack.c.l.b16 %v1117
    %v1310 = vunpack.c.l.b16 %v1118
    %v1311 = vunpack.c.l.b16 %v1119
    %v1312 = vunpack.c.l.b16 %v1120
    %v1313 = vunpack.c.l.b16 %v1121
    %v1314 = vunpack.c.l.b16 %v1122
    %v1315 = vunpack.c.l.b16 %v1123
    %v1316 = vunpack.c.l.b16 %v1124
    %v1317 = vunpack.c.l.b16 %v1125
    %v1318 = vunpack.c.l.b16 %v1126
    %v1319 = vunpack.c.l.b16 %v1127
    %v1320 = vunpack.c.l.b16 %v1128
    %v1321 = vunpack.c.l.b16 %v1129
    %v1322 = vunpack.c.l.b16 %v1130
    %v1323 = vunpack.c.l.b16 %v1131
    %v1324 = vunpack.c.l.b16 %v1132
    %v1325 = vunpack.c.l.b16 %v1133
    %v1326 = vunpack.c.l.b16 %v1134
    %v1327 = vunpack.c.l.b16 %v1135
    %v1328 = vunpack.c.l.b16 %v1136
    %v1329 = vunpack.c.l.b16 %v1137
    %v1330 = vpack.c.b16 %v1299, %v1298
    %v1331 = vpack.c.b16 %v1301, %v1300
    %v1332 = vpack.c.b16 %v1303, %v1302
    %v1333 = vpack.c.b16 %v1305, %v1304
    %v1334 = vpack.c.b16 %v1307, %v1306
    %v1335 = vpack.c.b16 %v1309, %v1308
    %v1336 = vpack.c.b16 %v1311, %v1310
    %v1337 = vpack.c.b16 %v1313, %v1312
    %v1338 = vpack.c.b16 %v1315, %v1314
    %v1339 = vpack.c.b16 %v1317, %v1316
    %v1340 = vpack.c.b16 %v1319, %v1318
    %v1341 = vpack.c.b16 %v1321, %v1320
    %v1342 = vpack.c.b16 %v1323, %v1322
    %v1343 = vpack.c.b16 %v1325, %v1324
    %v1344 = vpack.c.b16 %v1327, %v1326
    %v1345 = vpack.c.b16 %v1329, %v1328
    %1362 = vmatprep.subr.bf16.mxu0 0
    %1363 = vmatpush1.bf16.msra.mxu0 %v1337
    %1364 = vmatprep.subr.bf16.mxu0 0
    %1365 = vmatpush1.bf16.msra.mxu0 %v1336
    %1366 = vmatprep.subr.bf16.mxu0 0
    %1367 = vmatpush1.bf16.msra.mxu0 %v1335
    %1368 = vmatprep.subr.bf16.mxu0 0
    %1369 = vmatpush1.bf16.msra.mxu0 %v1334
    %1370 = vmatprep.subr.bf16.mxu0 0
    %1371 = vmatpush1.bf16.msra.mxu0 %v1333
    %1372 = vmatprep.subr.bf16.mxu0 0
    %1373 = vmatpush1.bf16.msra.mxu0 %v1332
    %1374 = vmatprep.subr.bf16.mxu0 0
    %1375 = vmatpush1.bf16.msra.mxu0 %v1331
    %1376 = vmatprep.subr.bf16.mxu0 0
    %1377 = vmatpush1.bf16.msra.mxu0 %v1330
    %1378 = vmatprep.subr.bf16.mxu0 0
    %1379 = vmatpush2.bf16.msra.mxu0 %v1345
    %1380 = vmatprep.subr.bf16.mxu0 0
    %1381 = vmatpush2.bf16.msra.mxu0 %v1344
    %1382 = vmatprep.subr.bf16.mxu0 0
    %1383 = vmatpush2.bf16.msra.mxu0 %v1343
    %1384 = vmatprep.subr.bf16.mxu0 0
    %1385 = vmatpush2.bf16.msra.mxu0 %v1342
    %1386 = vmatprep.subr.bf16.mxu0 0
    %1387 = vmatpush2.bf16.msra.mxu0 %v1341
    %1388 = vmatprep.subr.bf16.mxu0 0
    %1389 = vmatpush2.bf16.msra.mxu0 %v1340
    %1390 = vmatprep.subr.bf16.mxu0 0
    %1391 = vmatpush2.bf16.msra.mxu0 %v1339
    %1392 = vmatprep.subr.bf16.mxu0 0
    %1393 = vmatpush2.bf16.msra.mxu0 %v1338
    %1394 = vmatprep.mubr.bf16.mxu0 %v1098
    %1395 = vmatmul.mubr.bf16.gmra.mxu0 %v1252
    %v1396 = vpop.f32.mrf.mxu0
    %v1397 = vadd.f32 %v1264, %v1396
    %v1398 = vpop.f32.mrf.mxu0
    %v1399 = vpop.f32.mrf.mxu0
    %v1400 = vadd.f32 %v1264, %v1399
    %v1401 = vpop.f32.mrf.mxu0
    %1402 = vmatprep.mubr.bf16.mxu0 %v1099
    %1403 = vmatmul.mubr.bf16.gmra.mxu0 %v1253
    %v1404 = vpop.f32.mrf.mxu0
    %v1405 = vadd.f32 %v1264, %v1404
    %v1406 = vpop.f32.mrf.mxu0
    %v1407 = vpop.f32.mrf.mxu0
    %v1408 = vadd.f32 %v1264, %v1407
    %v1409 = vpop.f32.mrf.mxu0
    %1410 = vmatprep.mubr.bf16.mxu0 %v1100
    %1411 = vmatmul.mubr.bf16.gmra.mxu0 %v1254
    %v1412 = vpop.f32.mrf.mxu0
    %v1413 = vadd.f32 %v1264, %v1412
    %v1414 = vpop.f32.mrf.mxu0
    %v1415 = vpop.f32.mrf.mxu0
    %v1416 = vadd.f32 %v1264, %v1415
    %v1417 = vpop.f32.mrf.mxu0
    %1418 = vmatprep.mubr.bf16.mxu0 %v1101
    %1419 = vmatmul.mubr.bf16.gmra.mxu0 %v1255
    %v1420 = vpop.f32.mrf.mxu0
    %v1421 = vadd.f32 %v1264, %v1420
    %v1422 = vpop.f32.mrf.mxu0
    %v1423 = vpop.f32.mrf.mxu0
    %v1424 = vadd.f32 %v1264, %v1423
    %v1425 = vpop.f32.mrf.mxu0
    %1426 = vmatprep.mubr.bf16.mxu0 %v1102
    %1427 = vmatmul.mubr.bf16.gmra.mxu0 %v1256
    %v1428 = vpop.f32.mrf.mxu0
    %v1429 = vadd.f32 %v1264, %v1428
    %v1430 = vpop.f32.mrf.mxu0
    %v1431 = vpop.f32.mrf.mxu0
    %v1432 = vadd.f32 %v1264, %v1431
    %v1433 = vpop.f32.mrf.mxu0
    %1434 = vmatprep.mubr.bf16.mxu0 %v1103
    %1435 = vmatmul.mubr.bf16.gmra.mxu0 %v1257
    %v1436 = vpop.f32.mrf.mxu0
    %v1437 = vadd.f32 %v1264, %v1436
    %v1438 = vpop.f32.mrf.mxu0
    %v1439 = vpop.f32.mrf.mxu0
    %v1440 = vadd.f32 %v1264, %v1439
    %v1441 = vpop.f32.mrf.mxu0
    %1442 = vmatprep.mubr.bf16.mxu0 %v1104
    %1443 = vmatmul.mubr.bf16.gmra.mxu0 %v1258
    %v1444 = vpop.f32.mrf.mxu0
    %v1445 = vadd.f32 %v1264, %v1444
    %v1446 = vpop.f32.mrf.mxu0
    %v1447 = vpop.f32.mrf.mxu0
    %v1448 = vadd.f32 %v1264, %v1447
    %v1449 = vpop.f32.mrf.mxu0
    %1450 = vmatprep.mubr.bf16.mxu0 %v1105
    %1451 = vmatmul.mubr.bf16.gmra.mxu0 %v1259
    %v1452 = vpop.f32.mrf.mxu0
    %v1453 = vadd.f32 %v1264, %v1452
    %v1454 = vpop.f32.mrf.mxu0
    %v1455 = vpop.f32.mrf.mxu0
    %v1456 = vadd.f32 %v1264, %v1455
    %v1457 = vpop.f32.mrf.mxu0
    %1458 = vdwg.mxu0
    %v1459 = vmax.f32 %v1397, 0.0
    %v1460 = vmax.f32 %v1400, 0.0
    %v1461 = vmax.f32 %v1405, 0.0
    %v1462 = vmax.f32 %v1408, 0.0
    %v1463 = vmax.f32 %v1413, 0.0
    %v1464 = vmax.f32 %v1416, 0.0
    %v1465 = vmax.f32 %v1421, 0.0
    %v1466 = vmax.f32 %v1424, 0.0
    %v1467 = vmax.f32 %v1429, 0.0
    %v1468 = vmax.f32 %v1432, 0.0
    %v1469 = vmax.f32 %v1437, 0.0
    %v1470 = vmax.f32 %v1440, 0.0
    %v1471 = vmax.f32 %v1445, 0.0
    %v1472 = vmax.f32 %v1448, 0.0
    %v1473 = vmax.f32 %v1453, 0.0
    %v1474 = vmax.f32 %v1456, 0.0
    %v1475 = vpack.c.bf16 %v1460, %v1459
    %v1476 = vpack.c.bf16 %v1462, %v1461
    %v1477 = vpack.c.bf16 %v1464, %v1463
    %v1478 = vpack.c.bf16 %v1466, %v1465
    %v1479 = vpack.c.bf16 %v1468, %v1467
    %v1480 = vpack.c.bf16 %v1470, %v1469
    %v1481 = vpack.c.bf16 %v1472, %v1471
    %v1482 = vpack.c.bf16 %v1474, %v1473
    %v1483 = vld [vmem:[#allocation10] sm:$0xf]
    %v1484 = vld [vmem:[#allocation10 + $0x4] sm:$0xf]
    %v1485 = vld [vmem:[#allocation10 + $0x8] sm:$0xf]
    %v1486 = vld [vmem:[#allocation10 + $0xc] sm:$0xf]
    %v1487 = vld [vmem:[#allocation10 + $0x10] sm:$0xf]
    %v1488 = vld [vmem:[#allocation10 + $0x14] sm:$0xf]
    %v1489 = vld [vmem:[#allocation10 + $0x18] sm:$0xf]
    %v1490 = vld [vmem:[#allocation10 + $0x1c] sm:$0xf]
    %v1491 = vld [vmem:[#allocation10 + $0x20] sm:$0xf]
    %v1492 = vld [vmem:[#allocation10 + $0x24] sm:$0xf]
    %v1493 = vld [vmem:[#allocation10 + $0x28] sm:$0xf]
    %v1494 = vld [vmem:[#allocation10 + $0x2c] sm:$0xf]
    %v1495 = vld [vmem:[#allocation10 + $0x30] sm:$0xf]
    %v1496 = vld [vmem:[#allocation10 + $0x34] sm:$0xf]
    %v1497 = vld [vmem:[#allocation10 + $0x38] sm:$0xf]
    %v1498 = vld [vmem:[#allocation10 + $0x3c] sm:$0xf]
    %v1499 = vld [vmem:[#allocation10 + $0x40] sm:$0xf]
    %v1500 = vld [vmem:[#allocation10 + $0x44] sm:$0xf]
    %v1501 = vld [vmem:[#allocation10 + $0x48] sm:$0xf]
    %v1502 = vld [vmem:[#allocation10 + $0x4c] sm:$0xf]
    %v1503 = vld [vmem:[#allocation10 + $0x50] sm:$0xf]
    %v1504 = vld [vmem:[#allocation10 + $0x54] sm:$0xf]
    %v1505 = vld [vmem:[#allocation10 + $0x58] sm:$0xf]
    %v1506 = vld [vmem:[#allocation10 + $0x5c] sm:$0xf]
    %v1507 = vld [vmem:[#allocation10 + $0x60] sm:$0xf]
    %v1508 = vld [vmem:[#allocation10 + $0x64] sm:$0xf]
    %v1509 = vld [vmem:[#allocation10 + $0x68] sm:$0xf]
    %v1510 = vld [vmem:[#allocation10 + $0x6c] sm:$0xf]
    %v1511 = vld [vmem:[#allocation10 + $0x70] sm:$0xf]
    %v1512 = vld [vmem:[#allocation10 + $0x74] sm:$0xf]
    %v1513 = vld [vmem:[#allocation10 + $0x78] sm:$0xf]
    %v1514 = vld [vmem:[#allocation10 + $0x7c] sm:$0xf]
    %v1515 = vld [vmem:[%s10] sm:$0x1]
    %1516 = vmatprep.subr.bf16.mxu0 0
    %1517 = vmatpush1.bf16.msra.mxu0 %v1482
    %1518 = vmatprep.subr.bf16.mxu0 0
    %1519 = vmatpush1.bf16.msra.mxu0 %v1481
    %1520 = vmatprep.subr.bf16.mxu0 0
    %1521 = vmatpush1.bf16.msra.mxu0 %v1480
    %1522 = vmatprep.subr.bf16.mxu0 0
    %1523 = vmatpush1.bf16.msra.mxu0 %v1479
    %1524 = vmatprep.subr.bf16.mxu0 0
    %1525 = vmatpush1.bf16.msra.mxu0 %v1478
    %1526 = vmatprep.subr.bf16.mxu0 0
    %1527 = vmatpush1.bf16.msra.mxu0 %v1477
    %1528 = vmatprep.subr.bf16.mxu0 0
    %1529 = vmatpush1.bf16.msra.mxu0 %v1476
    %1530 = vmatprep.subr.bf16.mxu0 0
    %1531 = vmatpush1.bf16.msra.mxu0 %v1475
    %1532 = vmatprep.subr.bf16.mxu0 0
    %1533 = vmatpush2.bf16.msra.mxu0 0
    %1534 = vmatprep.subr.bf16.mxu0 0
    %1535 = vmatpush2.bf16.msra.mxu0 0
    %1536 = vmatprep.subr.bf16.mxu0 0
    %1537 = vmatpush2.bf16.msra.mxu0 0
    %1538 = vmatprep.subr.bf16.mxu0 0
    %1539 = vmatpush2.bf16.msra.mxu0 0
    %1540 = vmatprep.subr.bf16.mxu0 0
    %1541 = vmatpush2.bf16.msra.mxu0 0
    %1542 = vmatprep.subr.bf16.mxu0 0
    %1543 = vmatpush2.bf16.msra.mxu0 0
    %1544 = vmatprep.subr.bf16.mxu0 0
    %1545 = vmatpush2.bf16.msra.mxu0 0
    %1546 = vmatprep.subr.bf16.mxu0 0
    %1547 = vmatpush2.bf16.msra.mxu0 0
    %1548 = vmatprep.mubr.bf16.mxu0 0
    %1549 = vmatmul.mubr.bf16.gmra.mxu0 %v241
    %v1550 = vpop.f32.mrf.mxu0
    %v1551 = vadd.f32 0.0, %v1550
    %v1552 = vpop.f32.mrf.mxu0
    %v1553 = vpop.f32.mrf.mxu0
    %v1554 = vadd.f32 0.0, %v1553
    %v1555 = vpop.f32.mrf.mxu0
    %1556 = vmatprep.mubr.bf16.mxu0 0
    %1557 = vmatmul.mubr.bf16.gmra.mxu0 %v242
    %v1558 = vpop.f32.mrf.mxu0
    %v1559 = vadd.f32 0.0, %v1558
    %v1560 = vpop.f32.mrf.mxu0
    %v1561 = vpop.f32.mrf.mxu0
    %v1562 = vadd.f32 0.0, %v1561
    %v1563 = vpop.f32.mrf.mxu0
    %1564 = vmatprep.mubr.bf16.mxu0 0
    %1565 = vmatmul.mubr.bf16.gmra.mxu0 %v243
    %v1566 = vpop.f32.mrf.mxu0
    %v1567 = vadd.f32 0.0, %v1566
    %v1568 = vpop.f32.mrf.mxu0
    %v1569 = vpop.f32.mrf.mxu0
    %v1570 = vadd.f32 0.0, %v1569
    %v1571 = vpop.f32.mrf.mxu0
    %1572 = vmatprep.mubr.bf16.mxu0 0
    %1573 = vmatmul.mubr.bf16.gmra.mxu0 %v244
    %v1574 = vpop.f32.mrf.mxu0
    %v1575 = vadd.f32 0.0, %v1574
    %v1576 = vpop.f32.mrf.mxu0
    %v1577 = vpop.f32.mrf.mxu0
    %v1578 = vadd.f32 0.0, %v1577
    %v1579 = vpop.f32.mrf.mxu0
    %1580 = vmatprep.mubr.bf16.mxu0 0
    %1581 = vmatmul.mubr.bf16.gmra.mxu0 %v245
    %v1582 = vpop.f32.mrf.mxu0
    %v1583 = vadd.f32 0.0, %v1582
    %v1584 = vpop.f32.mrf.mxu0
    %v1585 = vpop.f32.mrf.mxu0
    %v1586 = vadd.f32 0.0, %v1585
    %v1587 = vpop.f32.mrf.mxu0
    %1588 = vmatprep.mubr.bf16.mxu0 0
    %1589 = vmatmul.mubr.bf16.gmra.mxu0 %v246
    %v1590 = vpop.f32.mrf.mxu0
    %v1591 = vadd.f32 0.0, %v1590
    %v1592 = vpop.f32.mrf.mxu0
    %v1593 = vpop.f32.mrf.mxu0
    %v1594 = vadd.f32 0.0, %v1593
    %v1595 = vpop.f32.mrf.mxu0
    %1596 = vmatprep.mubr.bf16.mxu0 0
    %1597 = vmatmul.mubr.bf16.gmra.mxu0 %v247
    %v1598 = vpop.f32.mrf.mxu0
    %v1599 = vadd.f32 0.0, %v1598
    %v1600 = vpop.f32.mrf.mxu0
    %v1601 = vpop.f32.mrf.mxu0
    %v1602 = vadd.f32 0.0, %v1601
    %v1603 = vpop.f32.mrf.mxu0
    %1604 = vmatprep.mubr.bf16.mxu0 0
    %1605 = vmatmul.mubr.bf16.gmra.mxu0 %v248
    %v1606 = vpop.f32.mrf.mxu0
    %v1607 = vadd.f32 0.0, %v1606
    %v1608 = vpop.f32.mrf.mxu0
    %v1609 = vpop.f32.mrf.mxu0
    %v1610 = vadd.f32 0.0, %v1609
    %v1611 = vpop.f32.mrf.mxu0
    %1612 = vdwg.mxu0
    %v1613 = vmul.f32 %v1551, %v405
    %v1614 = vmul.f32 %v1554, %v410
    %v1615 = vmul.f32 %v1559, %v415
    %v1616 = vmul.f32 %v1562, %v420
    %v1617 = vmul.f32 %v1567, %v425
    %v1618 = vmul.f32 %v1570, %v430
    %v1619 = vmul.f32 %v1575, %v435
    %v1620 = vmul.f32 %v1578, %v440
    %v1621 = vmul.f32 %v1583, %v445
    %v1622 = vmul.f32 %v1586, %v450
    %v1623 = vmul.f32 %v1591, %v455
    %v1624 = vmul.f32 %v1594, %v460
    %v1625 = vmul.f32 %v1599, %v465
    %v1626 = vmul.f32 %v1602, %v470
    %v1627 = vmul.f32 %v1607, %v475
    %v1628 = vmul.f32 %v1610, %v480
    %v1629 = vpack.c.bf16 %v1614, %v1613
    %v1630 = vpack.c.bf16 %v1616, %v1615
    %v1631 = vpack.c.bf16 %v1618, %v1617
    %v1632 = vpack.c.bf16 %v1620, %v1619
    %v1633 = vpack.c.bf16 %v1622, %v1621
    %v1634 = vpack.c.bf16 %v1624, %v1623
    %v1635 = vpack.c.bf16 %v1626, %v1625
    %v1636 = vpack.c.bf16 %v1628, %v1627
    %v1638 = vlaneseq
    %v1639 = vshrl.u32 %v1638, 7
    %v1640 = vsub.s32 0, %v1639
    %v1641 = vrot.slane %v1515, %v1640
    %v1675 = vunpack.c.l.b16 %v1483
    %v1676 = vunpack.c.l.b16 %v1484
    %v1677 = vunpack.c.l.b16 %v1485
    %v1678 = vunpack.c.l.b16 %v1486
    %v1679 = vunpack.c.l.b16 %v1487
    %v1680 = vunpack.c.l.b16 %v1488
    %v1681 = vunpack.c.l.b16 %v1489
    %v1682 = vunpack.c.l.b16 %v1490
    %v1683 = vunpack.c.l.b16 %v1491
    %v1684 = vunpack.c.l.b16 %v1492
    %v1685 = vunpack.c.l.b16 %v1493
    %v1686 = vunpack.c.l.b16 %v1494
    %v1687 = vunpack.c.l.b16 %v1495
    %v1688 = vunpack.c.l.b16 %v1496
    %v1689 = vunpack.c.l.b16 %v1497
    %v1690 = vunpack.c.l.b16 %v1498
    %v1691 = vunpack.c.l.b16 %v1499
    %v1692 = vunpack.c.l.b16 %v1500
    %v1693 = vunpack.c.l.b16 %v1501
    %v1694 = vunpack.c.l.b16 %v1502
    %v1695 = vunpack.c.l.b16 %v1503
    %v1696 = vunpack.c.l.b16 %v1504
    %v1697 = vunpack.c.l.b16 %v1505
    %v1698 = vunpack.c.l.b16 %v1506
    %v1699 = vunpack.c.l.b16 %v1507
    %v1700 = vunpack.c.l.b16 %v1508
    %v1701 = vunpack.c.l.b16 %v1509
    %v1702 = vunpack.c.l.b16 %v1510
    %v1703 = vunpack.c.l.b16 %v1511
    %v1704 = vunpack.c.l.b16 %v1512
    %v1705 = vunpack.c.l.b16 %v1513
    %v1706 = vunpack.c.l.b16 %v1514
    %v1707 = vpack.c.b16 %v1676, %v1675
    %v1708 = vpack.c.b16 %v1678, %v1677
    %v1709 = vpack.c.b16 %v1680, %v1679
    %v1710 = vpack.c.b16 %v1682, %v1681
    %v1711 = vpack.c.b16 %v1684, %v1683
    %v1712 = vpack.c.b16 %v1686, %v1685
    %v1713 = vpack.c.b16 %v1688, %v1687
    %v1714 = vpack.c.b16 %v1690, %v1689
    %v1715 = vpack.c.b16 %v1692, %v1691
    %v1716 = vpack.c.b16 %v1694, %v1693
    %v1717 = vpack.c.b16 %v1696, %v1695
    %v1718 = vpack.c.b16 %v1698, %v1697
    %v1719 = vpack.c.b16 %v1700, %v1699
    %v1720 = vpack.c.b16 %v1702, %v1701
    %v1721 = vpack.c.b16 %v1704, %v1703
    %v1722 = vpack.c.b16 %v1706, %v1705
    %1739 = vmatprep.subr.bf16.mxu0 0
    %1740 = vmatpush1.bf16.msra.mxu0 %v1714
    %1741 = vmatprep.subr.bf16.mxu0 0
    %1742 = vmatpush1.bf16.msra.mxu0 %v1713
    %1743 = vmatprep.subr.bf16.mxu0 0
    %1744 = vmatpush1.bf16.msra.mxu0 %v1712
    %1745 = vmatprep.subr.bf16.mxu0 0
    %1746 = vmatpush1.bf16.msra.mxu0 %v1711
    %1747 = vmatprep.subr.bf16.mxu0 0
    %1748 = vmatpush1.bf16.msra.mxu0 %v1710
    %1749 = vmatprep.subr.bf16.mxu0 0
    %1750 = vmatpush1.bf16.msra.mxu0 %v1709
    %1751 = vmatprep.subr.bf16.mxu0 0
    %1752 = vmatpush1.bf16.msra.mxu0 %v1708
    %1753 = vmatprep.subr.bf16.mxu0 0
    %1754 = vmatpush1.bf16.msra.mxu0 %v1707
    %1755 = vmatprep.subr.bf16.mxu0 0
    %1756 = vmatpush2.bf16.msra.mxu0 %v1722
    %1757 = vmatprep.subr.bf16.mxu0 0
    %1758 = vmatpush2.bf16.msra.mxu0 %v1721
    %1759 = vmatprep.subr.bf16.mxu0 0
    %1760 = vmatpush2.bf16.msra.mxu0 %v1720
    %1761 = vmatprep.subr.bf16.mxu0 0
    %1762 = vmatpush2.bf16.msra.mxu0 %v1719
    %1763 = vmatprep.subr.bf16.mxu0 0
    %1764 = vmatpush2.bf16.msra.mxu0 %v1718
    %1765 = vmatprep.subr.bf16.mxu0 0
    %1766 = vmatpush2.bf16.msra.mxu0 %v1717
    %1767 = vmatprep.subr.bf16.mxu0 0
    %1768 = vmatpush2.bf16.msra.mxu0 %v1716
    %1769 = vmatprep.subr.bf16.mxu0 0
    %1770 = vmatpush2.bf16.msra.mxu0 %v1715
    %1771 = vmatprep.mubr.bf16.mxu0 %v1475
    %1772 = vmatmul.mubr.bf16.gmra.mxu0 %v1629
    %v1773 = vpop.f32.mrf.mxu0
    %v1774 = vadd.f32 %v1641, %v1773
    %v1775 = vpop.f32.mrf.mxu0
    %v1776 = vpop.f32.mrf.mxu0
    %v1777 = vadd.f32 %v1641, %v1776
    %v1778 = vpop.f32.mrf.mxu0
    %1779 = vmatprep.mubr.bf16.mxu0 %v1476
    %1780 = vmatmul.mubr.bf16.gmra.mxu0 %v1630
    %v1781 = vpop.f32.mrf.mxu0
    %v1782 = vadd.f32 %v1641, %v1781
    %v1783 = vpop.f32.mrf.mxu0
    %v1784 = vpop.f32.mrf.mxu0
    %v1785 = vadd.f32 %v1641, %v1784
    %v1786 = vpop.f32.mrf.mxu0
    %1787 = vmatprep.mubr.bf16.mxu0 %v1477
    %1788 = vmatmul.mubr.bf16.gmra.mxu0 %v1631
    %v1789 = vpop.f32.mrf.mxu0
    %v1790 = vadd.f32 %v1641, %v1789
    %v1791 = vpop.f32.mrf.mxu0
    %v1792 = vpop.f32.mrf.mxu0
    %v1793 = vadd.f32 %v1641, %v1792
    %v1794 = vpop.f32.mrf.mxu0
    %1795 = vmatprep.mubr.bf16.mxu0 %v1478
    %1796 = vmatmul.mubr.bf16.gmra.mxu0 %v1632
    %v1797 = vpop.f32.mrf.mxu0
    %v1798 = vadd.f32 %v1641, %v1797
    %v1799 = vpop.f32.mrf.mxu0
    %v1800 = vpop.f32.mrf.mxu0
    %v1801 = vadd.f32 %v1641, %v1800
    %v1802 = vpop.f32.mrf.mxu0
    %1803 = vmatprep.mubr.bf16.mxu0 %v1479
    %1804 = vmatmul.mubr.bf16.gmra.mxu0 %v1633
    %v1805 = vpop.f32.mrf.mxu0
    %v1806 = vadd.f32 %v1641, %v1805
    %v1807 = vpop.f32.mrf.mxu0
    %v1808 = vpop.f32.mrf.mxu0
    %v1809 = vadd.f32 %v1641, %v1808
    %v1810 = vpop.f32.mrf.mxu0
    %1811 = vmatprep.mubr.bf16.mxu0 %v1480
    %1812 = vmatmul.mubr.bf16.gmra.mxu0 %v1634
    %v1813 = vpop.f32.mrf.mxu0
    %v1814 = vadd.f32 %v1641, %v1813
    %v1815 = vpop.f32.mrf.mxu0
    %v1816 = vpop.f32.mrf.mxu0
    %v1817 = vadd.f32 %v1641, %v1816
    %v1818 = vpop.f32.mrf.mxu0
    %1819 = vmatprep.mubr.bf16.mxu0 %v1481
    %1820 = vmatmul.mubr.bf16.gmra.mxu0 %v1635
    %v1821 = vpop.f32.mrf.mxu0
    %v1822 = vadd.f32 %v1641, %v1821
    %v1823 = vpop.f32.mrf.mxu0
    %v1824 = vpop.f32.mrf.mxu0
    %v1825 = vadd.f32 %v1641, %v1824
    %v1826 = vpop.f32.mrf.mxu0
    %1827 = vmatprep.mubr.bf16.mxu0 %v1482
    %1828 = vmatmul.mubr.bf16.gmra.mxu0 %v1636
    %v1829 = vpop.f32.mrf.mxu0
    %v1830 = vadd.f32 %v1641, %v1829
    %v1831 = vpop.f32.mrf.mxu0
    %v1832 = vpop.f32.mrf.mxu0
    %v1833 = vadd.f32 %v1641, %v1832
    %v1834 = vpop.f32.mrf.mxu0
    %1835 = vdwg.mxu0
    %v1836 = vpack.c.bf16 %v1777, %v1774
    %v1837 = vpack.c.bf16 %v1785, %v1782
    %v1838 = vpack.c.bf16 %v1793, %v1790
    %v1839 = vpack.c.bf16 %v1801, %v1798
    %v1840 = vpack.c.bf16 %v1809, %v1806
    %v1841 = vpack.c.bf16 %v1817, %v1814
    %v1842 = vpack.c.bf16 %v1825, %v1822
    %v1843 = vpack.c.bf16 %v1833, %v1830
    %v1844 = vld [vmem:[#allocation11] sm:$0xf]
    %v1845 = vld [vmem:[#allocation11 + $0x4] sm:$0xf]
    %v1846 = vld [vmem:[#allocation11 + $0x8] sm:$0xf]
    %v1847 = vld [vmem:[#allocation11 + $0xc] sm:$0xf]
    %v1848 = vld [vmem:[#allocation11 + $0x10] sm:$0xf]
    %v1849 = vld [vmem:[#allocation11 + $0x14] sm:$0xf]
    %v1850 = vld [vmem:[#allocation11 + $0x18] sm:$0xf]
    %v1851 = vld [vmem:[#allocation11 + $0x1c] sm:$0xf]
    %v1852 = vld [vmem:[#allocation11 + $0x20] sm:$0xf]
    %v1853 = vld [vmem:[#allocation11 + $0x24] sm:$0xf]
    %v1854 = vld [vmem:[#allocation11 + $0x28] sm:$0xf]
    %v1855 = vld [vmem:[#allocation11 + $0x2c] sm:$0xf]
    %v1856 = vld [vmem:[#allocation11 + $0x30] sm:$0xf]
    %v1857 = vld [vmem:[#allocation11 + $0x34] sm:$0xf]
    %v1858 = vld [vmem:[#allocation11 + $0x38] sm:$0xf]
    %v1859 = vld [vmem:[#allocation11 + $0x3c] sm:$0xf]
    %v1860 = vld [vmem:[#allocation11 + $0x40] sm:$0xf]
    %v1861 = vld [vmem:[#allocation11 + $0x44] sm:$0xf]
    %v1862 = vld [vmem:[#allocation11 + $0x48] sm:$0xf]
    %v1863 = vld [vmem:[#allocation11 + $0x4c] sm:$0xf]
    %v1864 = vld [vmem:[#allocation11 + $0x50] sm:$0xf]
    %v1865 = vld [vmem:[#allocation11 + $0x54] sm:$0xf]
    %v1866 = vld [vmem:[#allocation11 + $0x58] sm:$0xf]
    %v1867 = vld [vmem:[#allocation11 + $0x5c] sm:$0xf]
    %v1868 = vld [vmem:[#allocation11 + $0x60] sm:$0xf]
    %v1869 = vld [vmem:[#allocation11 + $0x64] sm:$0xf]
    %v1870 = vld [vmem:[#allocation11 + $0x68] sm:$0xf]
    %v1871 = vld [vmem:[#allocation11 + $0x6c] sm:$0xf]
    %v1872 = vld [vmem:[#allocation11 + $0x70] sm:$0xf]
    %v1873 = vld [vmem:[#allocation11 + $0x74] sm:$0xf]
    %v1874 = vld [vmem:[#allocation11 + $0x78] sm:$0xf]
    %v1875 = vld [vmem:[#allocation11 + $0x7c] sm:$0xf]
    %v1876 = vld [vmem:[%s12] sm:$0x1]
    %1877 = vmatprep.subr.bf16.mxu0 0
    %1878 = vmatpush1.bf16.msra.mxu0 %v1843
    %1879 = vmatprep.subr.bf16.mxu0 0
    %1880 = vmatpush1.bf16.msra.mxu0 %v1842
    %1881 = vmatprep.subr.bf16.mxu0 0
    %1882 = vmatpush1.bf16.msra.mxu0 %v1841
    %1883 = vmatprep.subr.bf16.mxu0 0
    %1884 = vmatpush1.bf16.msra.mxu0 %v1840
    %1885 = vmatprep.subr.bf16.mxu0 0
    %1886 = vmatpush1.bf16.msra.mxu0 %v1839
    %1887 = vmatprep.subr.bf16.mxu0 0
    %1888 = vmatpush1.bf16.msra.mxu0 %v1838
    %1889 = vmatprep.subr.bf16.mxu0 0
    %1890 = vmatpush1.bf16.msra.mxu0 %v1837
    %1891 = vmatprep.subr.bf16.mxu0 0
    %1892 = vmatpush1.bf16.msra.mxu0 %v1836
    %1893 = vmatprep.subr.bf16.mxu0 0
    %1894 = vmatpush2.bf16.msra.mxu0 0
    %1895 = vmatprep.subr.bf16.mxu0 0
    %1896 = vmatpush2.bf16.msra.mxu0 0
    %1897 = vmatprep.subr.bf16.mxu0 0
    %1898 = vmatpush2.bf16.msra.mxu0 0
    %1899 = vmatprep.subr.bf16.mxu0 0
    %1900 = vmatpush2.bf16.msra.mxu0 0
    %1901 = vmatprep.subr.bf16.mxu0 0
    %1902 = vmatpush2.bf16.msra.mxu0 0
    %1903 = vmatprep.subr.bf16.mxu0 0
    %1904 = vmatpush2.bf16.msra.mxu0 0
    %1905 = vmatprep.subr.bf16.mxu0 0
    %1906 = vmatpush2.bf16.msra.mxu0 0
    %1907 = vmatprep.subr.bf16.mxu0 0
    %1908 = vmatpush2.bf16.msra.mxu0 0
    %1909 = vmatprep.mubr.bf16.mxu0 0
    %1910 = vmatmul.mubr.bf16.gmra.mxu0 %v241
    %v1911 = vpop.f32.mrf.mxu0
    %v1912 = vadd.f32 0.0, %v1911
    %v1913 = vpop.f32.mrf.mxu0
    %v1914 = vpop.f32.mrf.mxu0
    %v1915 = vadd.f32 0.0, %v1914
    %v1916 = vpop.f32.mrf.mxu0
    %1917 = vmatprep.mubr.bf16.mxu0 0
    %1918 = vmatmul.mubr.bf16.gmra.mxu0 %v242
    %v1919 = vpop.f32.mrf.mxu0
    %v1920 = vadd.f32 0.0, %v1919
    %v1921 = vpop.f32.mrf.mxu0
    %v1922 = vpop.f32.mrf.mxu0
    %v1923 = vadd.f32 0.0, %v1922
    %v1924 = vpop.f32.mrf.mxu0
    %1925 = vmatprep.mubr.bf16.mxu0 0
    %1926 = vmatmul.mubr.bf16.gmra.mxu0 %v243
    %v1927 = vpop.f32.mrf.mxu0
    %v1928 = vadd.f32 0.0, %v1927
    %v1929 = vpop.f32.mrf.mxu0
    %v1930 = vpop.f32.mrf.mxu0
    %v1931 = vadd.f32 0.0, %v1930
    %v1932 = vpop.f32.mrf.mxu0
    %1933 = vmatprep.mubr.bf16.mxu0 0
    %1934 = vmatmul.mubr.bf16.gmra.mxu0 %v244
    %v1935 = vpop.f32.mrf.mxu0
    %v1936 = vadd.f32 0.0, %v1935
    %v1937 = vpop.f32.mrf.mxu0
    %v1938 = vpop.f32.mrf.mxu0
    %v1939 = vadd.f32 0.0, %v1938
    %v1940 = vpop.f32.mrf.mxu0
    %1941 = vmatprep.mubr.bf16.mxu0 0
    %1942 = vmatmul.mubr.bf16.gmra.mxu0 %v245
    %v1943 = vpop.f32.mrf.mxu0
    %v1944 = vadd.f32 0.0, %v1943
    %v1945 = vpop.f32.mrf.mxu0
    %v1946 = vpop.f32.mrf.mxu0
    %v1947 = vadd.f32 0.0, %v1946
    %v1948 = vpop.f32.mrf.mxu0
    %1949 = vmatprep.mubr.bf16.mxu0 0
    %1950 = vmatmul.mubr.bf16.gmra.mxu0 %v246
    %v1951 = vpop.f32.mrf.mxu0
    %v1952 = vadd.f32 0.0, %v1951
    %v1953 = vpop.f32.mrf.mxu0
    %v1954 = vpop.f32.mrf.mxu0
    %v1955 = vadd.f32 0.0, %v1954
    %v1956 = vpop.f32.mrf.mxu0
    %1957 = vmatprep.mubr.bf16.mxu0 0
    %1958 = vmatmul.mubr.bf16.gmra.mxu0 %v247
    %v1959 = vpop.f32.mrf.mxu0
    %v1960 = vadd.f32 0.0, %v1959
    %v1961 = vpop.f32.mrf.mxu0
    %v1962 = vpop.f32.mrf.mxu0
    %v1963 = vadd.f32 0.0, %v1962
    %v1964 = vpop.f32.mrf.mxu0
    %1965 = vmatprep.mubr.bf16.mxu0 0
    %1966 = vmatmul.mubr.bf16.gmra.mxu0 %v248
    %v1967 = vpop.f32.mrf.mxu0
    %v1968 = vadd.f32 0.0, %v1967
    %v1969 = vpop.f32.mrf.mxu0
    %v1970 = vpop.f32.mrf.mxu0
    %v1971 = vadd.f32 0.0, %v1970
    %v1972 = vpop.f32.mrf.mxu0
    %1973 = vdwg.mxu0
    %v1974 = vmul.f32 %v1912, %v405
    %v1975 = vmul.f32 %v1915, %v410
    %v1976 = vmul.f32 %v1920, %v415
    %v1977 = vmul.f32 %v1923, %v420
    %v1978 = vmul.f32 %v1928, %v425
    %v1979 = vmul.f32 %v1931, %v430
    %v1980 = vmul.f32 %v1936, %v435
    %v1981 = vmul.f32 %v1939, %v440
    %v1982 = vmul.f32 %v1944, %v445
    %v1983 = vmul.f32 %v1947, %v450
    %v1984 = vmul.f32 %v1952, %v455
    %v1985 = vmul.f32 %v1955, %v460
    %v1986 = vmul.f32 %v1960, %v465
    %v1987 = vmul.f32 %v1963, %v470
    %v1988 = vmul.f32 %v1968, %v475
    %v1989 = vmul.f32 %v1971, %v480
    %v1990 = vpack.c.bf16 %v1975, %v1974
    %v1991 = vpack.c.bf16 %v1977, %v1976
    %v1992 = vpack.c.bf16 %v1979, %v1978
    %v1993 = vpack.c.bf16 %v1981, %v1980
    %v1994 = vpack.c.bf16 %v1983, %v1982
    %v1995 = vpack.c.bf16 %v1985, %v1984
    %v1996 = vpack.c.bf16 %v1987, %v1986
    %v1997 = vpack.c.bf16 %v1989, %v1988
    %v1999 = vlaneseq
    %v2000 = vshrl.u32 %v1999, 7
    %v2001 = vsub.s32 0, %v2000
    %v2002 = vrot.slane %v1876, %v2001
    %v2036 = vunpack.c.l.b16 %v1844
    %v2037 = vunpack.c.l.b16 %v1845
    %v2038 = vunpack.c.l.b16 %v1846
    %v2039 = vunpack.c.l.b16 %v1847
    %v2040 = vunpack.c.l.b16 %v1848
    %v2041 = vunpack.c.l.b16 %v1849
    %v2042 = vunpack.c.l.b16 %v1850
    %v2043 = vunpack.c.l.b16 %v1851
    %v2044 = vunpack.c.l.b16 %v1852
    %v2045 = vunpack.c.l.b16 %v1853
    %v2046 = vunpack.c.l.b16 %v1854
    %v2047 = vunpack.c.l.b16 %v1855
    %v2048 = vunpack.c.l.b16 %v1856
    %v2049 = vunpack.c.l.b16 %v1857
    %v2050 = vunpack.c.l.b16 %v1858
    %v2051 = vunpack.c.l.b16 %v1859
    %v2052 = vunpack.c.l.b16 %v1860
    %v2053 = vunpack.c.l.b16 %v1861
    %v2054 = vunpack.c.l.b16 %v1862
    %v2055 = vunpack.c.l.b16 %v1863
    %v2056 = vunpack.c.l.b16 %v1864
    %v2057 = vunpack.c.l.b16 %v1865
    %v2058 = vunpack.c.l.b16 %v1866
    %v2059 = vunpack.c.l.b16 %v1867
    %v2060 = vunpack.c.l.b16 %v1868
    %v2061 = vunpack.c.l.b16 %v1869
    %v2062 = vunpack.c.l.b16 %v1870
    %v2063 = vunpack.c.l.b16 %v1871
    %v2064 = vunpack.c.l.b16 %v1872
    %v2065 = vunpack.c.l.b16 %v1873
    %v2066 = vunpack.c.l.b16 %v1874
    %v2067 = vunpack.c.l.b16 %v1875
    %v2068 = vpack.c.b16 %v2037, %v2036
    %v2069 = vpack.c.b16 %v2039, %v2038
    %v2070 = vpack.c.b16 %v2041, %v2040
    %v2071 = vpack.c.b16 %v2043, %v2042
    %v2072 = vpack.c.b16 %v2045, %v2044
    %v2073 = vpack.c.b16 %v2047, %v2046
    %v2074 = vpack.c.b16 %v2049, %v2048
    %v2075 = vpack.c.b16 %v2051, %v2050
    %v2076 = vpack.c.b16 %v2053, %v2052
    %v2077 = vpack.c.b16 %v2055, %v2054
    %v2078 = vpack.c.b16 %v2057, %v2056
    %v2079 = vpack.c.b16 %v2059, %v2058
    %v2080 = vpack.c.b16 %v2061, %v2060
    %v2081 = vpack.c.b16 %v2063, %v2062
    %v2082 = vpack.c.b16 %v2065, %v2064
    %v2083 = vpack.c.b16 %v2067, %v2066
    %2100 = vmatprep.subr.bf16.mxu0 0
    %2101 = vmatpush1.bf16.msra.mxu0 %v2075
    %2102 = vmatprep.subr.bf16.mxu0 0
    %2103 = vmatpush1.bf16.msra.mxu0 %v2074
    %2104 = vmatprep.subr.bf16.mxu0 0
    %2105 = vmatpush1.bf16.msra.mxu0 %v2073
    %2106 = vmatprep.subr.bf16.mxu0 0
    %2107 = vmatpush1.bf16.msra.mxu0 %v2072
    %2108 = vmatprep.subr.bf16.mxu0 0
    %2109 = vmatpush1.bf16.msra.mxu0 %v2071
    %2110 = vmatprep.subr.bf16.mxu0 0
    %2111 = vmatpush1.bf16.msra.mxu0 %v2070
    %2112 = vmatprep.subr.bf16.mxu0 0
    %2113 = vmatpush1.bf16.msra.mxu0 %v2069
    %2114 = vmatprep.subr.bf16.mxu0 0
    %2115 = vmatpush1.bf16.msra.mxu0 %v2068
    %2116 = vmatprep.subr.bf16.mxu0 0
    %2117 = vmatpush2.bf16.msra.mxu0 %v2083
    %2118 = vmatprep.subr.bf16.mxu0 0
    %2119 = vmatpush2.bf16.msra.mxu0 %v2082
    %2120 = vmatprep.subr.bf16.mxu0 0
    %2121 = vmatpush2.bf16.msra.mxu0 %v2081
    %2122 = vmatprep.subr.bf16.mxu0 0
    %2123 = vmatpush2.bf16.msra.mxu0 %v2080
    %2124 = vmatprep.subr.bf16.mxu0 0
    %2125 = vmatpush2.bf16.msra.mxu0 %v2079
    %2126 = vmatprep.subr.bf16.mxu0 0
    %2127 = vmatpush2.bf16.msra.mxu0 %v2078
    %2128 = vmatprep.subr.bf16.mxu0 0
    %2129 = vmatpush2.bf16.msra.mxu0 %v2077
    %2130 = vmatprep.subr.bf16.mxu0 0
    %2131 = vmatpush2.bf16.msra.mxu0 %v2076
    %2132 = vmatprep.mubr.bf16.mxu0 %v1836
    %2133 = vmatmul.mubr.bf16.gmra.mxu0 %v1990
    %v2134 = vpop.f32.mrf.mxu0
    %v2135 = vadd.f32 %v2002, %v2134
    %v2136 = vpop.f32.mrf.mxu0
    %v2137 = vpop.f32.mrf.mxu0
    %v2138 = vadd.f32 %v2002, %v2137
    %v2139 = vpop.f32.mrf.mxu0
    %2140 = vmatprep.mubr.bf16.mxu0 %v1837
    %2141 = vmatmul.mubr.bf16.gmra.mxu0 %v1991
    %v2142 = vpop.f32.mrf.mxu0
    %v2143 = vadd.f32 %v2002, %v2142
    %v2144 = vpop.f32.mrf.mxu0
    %v2145 = vpop.f32.mrf.mxu0
    %v2146 = vadd.f32 %v2002, %v2145
    %v2147 = vpop.f32.mrf.mxu0
    %2148 = vmatprep.mubr.bf16.mxu0 %v1838
    %2149 = vmatmul.mubr.bf16.gmra.mxu0 %v1992
    %v2150 = vpop.f32.mrf.mxu0
    %v2151 = vadd.f32 %v2002, %v2150
    %v2152 = vpop.f32.mrf.mxu0
    %v2153 = vpop.f32.mrf.mxu0
    %v2154 = vadd.f32 %v2002, %v2153
    %v2155 = vpop.f32.mrf.mxu0
    %2156 = vmatprep.mubr.bf16.mxu0 %v1839
    %2157 = vmatmul.mubr.bf16.gmra.mxu0 %v1993
    %v2158 = vpop.f32.mrf.mxu0
    %v2159 = vadd.f32 %v2002, %v2158
    %v2160 = vpop.f32.mrf.mxu0
    %v2161 = vpop.f32.mrf.mxu0
    %v2162 = vadd.f32 %v2002, %v2161
    %v2163 = vpop.f32.mrf.mxu0
    %2164 = vmatprep.mubr.bf16.mxu0 %v1840
    %2165 = vmatmul.mubr.bf16.gmra.mxu0 %v1994
    %v2166 = vpop.f32.mrf.mxu0
    %v2167 = vadd.f32 %v2002, %v2166
    %v2168 = vpop.f32.mrf.mxu0
    %v2169 = vpop.f32.mrf.mxu0
    %v2170 = vadd.f32 %v2002, %v2169
    %v2171 = vpop.f32.mrf.mxu0
    %2172 = vmatprep.mubr.bf16.mxu0 %v1841
    %2173 = vmatmul.mubr.bf16.gmra.mxu0 %v1995
    %v2174 = vpop.f32.mrf.mxu0
    %v2175 = vadd.f32 %v2002, %v2174
    %v2176 = vpop.f32.mrf.mxu0
    %v2177 = vpop.f32.mrf.mxu0
    %v2178 = vadd.f32 %v2002, %v2177
    %v2179 = vpop.f32.mrf.mxu0
    %2180 = vmatprep.mubr.bf16.mxu0 %v1842
    %2181 = vmatmul.mubr.bf16.gmra.mxu0 %v1996
    %v2182 = vpop.f32.mrf.mxu0
    %v2183 = vadd.f32 %v2002, %v2182
    %v2184 = vpop.f32.mrf.mxu0
    %v2185 = vpop.f32.mrf.mxu0
    %v2186 = vadd.f32 %v2002, %v2185
    %v2187 = vpop.f32.mrf.mxu0
    %2188 = vmatprep.mubr.bf16.mxu0 %v1843
    %2189 = vmatmul.mubr.bf16.gmra.mxu0 %v1997
    %v2190 = vpop.f32.mrf.mxu0
    %v2191 = vadd.f32 %v2002, %v2190
    %v2192 = vpop.f32.mrf.mxu0
    %v2193 = vpop.f32.mrf.mxu0
    %v2194 = vadd.f32 %v2002, %v2193
    %v2195 = vpop.f32.mrf.mxu0
    %2196 = vdwg.mxu0
    %v2197 = vlaneseq
    %v2198 = vand.u32 %v2197, 127
    %vm2199 = vcmp.lt.s32.totalorder %v2198, 8
    %v2200 = vsel %vm2199, %v2135, -1e+30
    %v2201 = vsel %vm2199, %v2138, -1e+30
    %v2202 = vsel %vm2199, %v2143, -1e+30
    %v2203 = vsel %vm2199, %v2146, -1e+30
    %v2204 = vsel %vm2199, %v2151, -1e+30
    %v2205 = vsel %vm2199, %v2154, -1e+30
    %v2206 = vsel %vm2199, %v2159, -1e+30
    %v2207 = vsel %vm2199, %v2162, -1e+30
    %v2208 = vsel %vm2199, %v2167, -1e+30
    %v2209 = vsel %vm2199, %v2170, -1e+30
    %v2210 = vsel %vm2199, %v2175, -1e+30
    %v2211 = vsel %vm2199, %v2178, -1e+30
    %v2212 = vsel %vm2199, %v2183, -1e+30
    %v2213 = vsel %vm2199, %v2186, -1e+30
    %v2214 = vsel %vm2199, %v2191, -1e+30
    %v2215 = vsel %vm2199, %v2194, -1e+30
    %2216 = vmax.xlane.f32.xlu0 %v2200
    %v2217 = vpop.xlane.xlu0 %2216
    %2218 = vmax.xlane.f32.xlu0 %v2201
    %v2219 = vpop.xlane.xlu0 %2218
    %2220 = vmax.xlane.f32.xlu0 %v2202
    %v2221 = vpop.xlane.xlu0 %2220
    %2222 = vmax.xlane.f32.xlu0 %v2203
    %v2223 = vpop.xlane.xlu0 %2222
    %2224 = vmax.xlane.f32.xlu0 %v2204
    %v2225 = vpop.xlane.xlu0 %2224
    %2226 = vmax.xlane.f32.xlu0 %v2205
    %v2227 = vpop.xlane.xlu0 %2226
    %2228 = vmax.xlane.f32.xlu0 %v2206
    %v2229 = vpop.xlane.xlu0 %2228
    %2230 = vmax.xlane.f32.xlu0 %v2207
    %v2231 = vpop.xlane.xlu0 %2230
    %2232 = vmax.xlane.f32.xlu0 %v2208
    %v2233 = vpop.xlane.xlu0 %2232
    %2234 = vmax.xlane.f32.xlu0 %v2209
    %v2235 = vpop.xlane.xlu0 %2234
    %2236 = vmax.xlane.f32.xlu0 %v2210
    %v2237 = vpop.xlane.xlu0 %2236
    %2238 = vmax.xlane.f32.xlu0 %v2211
    %v2239 = vpop.xlane.xlu0 %2238
    %2240 = vmax.xlane.f32.xlu0 %v2212
    %v2241 = vpop.xlane.xlu0 %2240
    %2242 = vmax.xlane.f32.xlu0 %v2213
    %v2243 = vpop.xlane.xlu0 %2242
    %2244 = vmax.xlane.f32.xlu0 %v2214
    %v2245 = vpop.xlane.xlu0 %2244
    %2246 = vmax.xlane.f32.xlu0 %v2215
    %v2247 = vpop.xlane.xlu0 %2246
    %v2248 = vsub.f32 %v2200, %v2217
    %v2249 = vsub.f32 %v2201, %v2219
    %v2250 = vsub.f32 %v2202, %v2221
    %v2251 = vsub.f32 %v2203, %v2223
    %v2252 = vsub.f32 %v2204, %v2225
    %v2253 = vsub.f32 %v2205, %v2227
    %v2254 = vsub.f32 %v2206, %v2229
    %v2255 = vsub.f32 %v2207, %v2231
    %v2256 = vsub.f32 %v2208, %v2233
    %v2257 = vsub.f32 %v2209, %v2235
    %v2258 = vsub.f32 %v2210, %v2237
    %v2259 = vsub.f32 %v2211, %v2239
    %v2260 = vsub.f32 %v2212, %v2241
    %v2261 = vsub.f32 %v2213, %v2243
    %v2262 = vsub.f32 %v2214, %v2245
    %v2263 = vsub.f32 %v2215, %v2247
    %v2264 = vmul.f32 %v2248, 1.442695
    %v2265 = vpow.pop %v2264
    %v2266 = vmul.f32 %v2249, 1.442695
    %v2267 = vpow.pop %v2266
    %v2268 = vmul.f32 %v2250, 1.442695
    %v2269 = vpow.pop %v2268
    %v2270 = vmul.f32 %v2251, 1.442695
    %v2271 = vpow.pop %v2270
    %v2272 = vmul.f32 %v2252, 1.442695
    %v2273 = vpow.pop %v2272
    %v2274 = vmul.f32 %v2253, 1.442695
    %v2275 = vpow.pop %v2274
    %v2276 = vmul.f32 %v2254, 1.442695
    %v2277 = vpow.pop %v2276
    %v2278 = vmul.f32 %v2255, 1.442695
    %v2279 = vpow.pop %v2278
    %v2280 = vmul.f32 %v2256, 1.442695
    %v2281 = vpow.pop %v2280
    %v2282 = vmul.f32 %v2257, 1.442695
    %v2283 = vpow.pop %v2282
    %v2284 = vmul.f32 %v2258, 1.442695
    %v2285 = vpow.pop %v2284
    %v2286 = vmul.f32 %v2259, 1.442695
    %v2287 = vpow.pop %v2286
    %v2288 = vmul.f32 %v2260, 1.442695
    %v2289 = vpow.pop %v2288
    %v2290 = vmul.f32 %v2261, 1.442695
    %v2291 = vpow.pop %v2290
    %v2292 = vmul.f32 %v2262, 1.442695
    %v2293 = vpow.pop %v2292
    %v2294 = vmul.f32 %v2263, 1.442695
    %v2295 = vpow.pop %v2294
    %2296 = vadd.xlane.f32.xlu0 %v2265
    %v2297 = vpop.xlane.xlu0 %2296
    %2298 = vadd.xlane.f32.xlu0 %v2267
    %v2299 = vpop.xlane.xlu0 %2298
    %2300 = vadd.xlane.f32.xlu0 %v2269
    %v2301 = vpop.xlane.xlu0 %2300
    %2302 = vadd.xlane.f32.xlu0 %v2271
    %v2303 = vpop.xlane.xlu0 %2302
    %2304 = vadd.xlane.f32.xlu0 %v2273
    %v2305 = vpop.xlane.xlu0 %2304
    %2306 = vadd.xlane.f32.xlu0 %v2275
    %v2307 = vpop.xlane.xlu0 %2306
    %2308 = vadd.xlane.f32.xlu0 %v2277
    %v2309 = vpop.xlane.xlu0 %2308
    %2310 = vadd.xlane.f32.xlu0 %v2279
    %v2311 = vpop.xlane.xlu0 %2310
    %2312 = vadd.xlane.f32.xlu0 %v2281
    %v2313 = vpop.xlane.xlu0 %2312
    %2314 = vadd.xlane.f32.xlu0 %v2283
    %v2315 = vpop.xlane.xlu0 %2314
    %2316 = vadd.xlane.f32.xlu0 %v2285
    %v2317 = vpop.xlane.xlu0 %2316
    %2318 = vadd.xlane.f32.xlu0 %v2287
    %v2319 = vpop.xlane.xlu0 %2318
    %2320 = vadd.xlane.f32.xlu0 %v2289
    %v2321 = vpop.xlane.xlu0 %2320
    %2322 = vadd.xlane.f32.xlu0 %v2291
    %v2323 = vpop.xlane.xlu0 %2322
    %2324 = vadd.xlane.f32.xlu0 %v2293
    %v2325 = vpop.xlane.xlu0 %2324
    %2326 = vadd.xlane.f32.xlu0 %v2295
    %v2327 = vpop.xlane.xlu0 %2326
    %v2328 = vlog2.pop %v2297
    %v2329 = vmul.f32 %v2328, 0.6931472
    %v2330 = vlog2.pop %v2299
    %v2331 = vmul.f32 %v2330, 0.6931472
    %v2332 = vlog2.pop %v2301
    %v2333 = vmul.f32 %v2332, 0.6931472
    %v2334 = vlog2.pop %v2303
    %v2335 = vmul.f32 %v2334, 0.6931472
    %v2336 = vlog2.pop %v2305
    %v2337 = vmul.f32 %v2336, 0.6931472
    %v2338 = vlog2.pop %v2307
    %v2339 = vmul.f32 %v2338, 0.6931472
    %v2340 = vlog2.pop %v2309
    %v2341 = vmul.f32 %v2340, 0.6931472
    %v2342 = vlog2.pop %v2311
    %v2343 = vmul.f32 %v2342, 0.6931472
    %v2344 = vlog2.pop %v2313
    %v2345 = vmul.f32 %v2344, 0.6931472
    %v2346 = vlog2.pop %v2315
    %v2347 = vmul.f32 %v2346, 0.6931472
    %v2348 = vlog2.pop %v2317
    %v2349 = vmul.f32 %v2348, 0.6931472
    %v2350 = vlog2.pop %v2319
    %v2351 = vmul.f32 %v2350, 0.6931472
    %v2352 = vlog2.pop %v2321
    %v2353 = vmul.f32 %v2352, 0.6931472
    %v2354 = vlog2.pop %v2323
    %v2355 = vmul.f32 %v2354, 0.6931472
    %v2356 = vlog2.pop %v2325
    %v2357 = vmul.f32 %v2356, 0.6931472
    %v2358 = vlog2.pop %v2327
    %v2359 = vmul.f32 %v2358, 0.6931472
    %v2360 = vsub.f32 %v2248, %v2329
    %v2361 = vsub.f32 %v2249, %v2331
    %v2362 = vsub.f32 %v2250, %v2333
    %v2363 = vsub.f32 %v2251, %v2335
    %v2364 = vsub.f32 %v2252, %v2337
    %v2365 = vsub.f32 %v2253, %v2339
    %v2366 = vsub.f32 %v2254, %v2341
    %v2367 = vsub.f32 %v2255, %v2343
    %v2368 = vsub.f32 %v2256, %v2345
    %v2369 = vsub.f32 %v2257, %v2347
    %v2370 = vsub.f32 %v2258, %v2349
    %v2371 = vsub.f32 %v2259, %v2351
    %v2372 = vsub.f32 %v2260, %v2353
    %v2373 = vsub.f32 %v2261, %v2355
    %v2374 = vsub.f32 %v2262, %v2357
    %v2375 = vsub.f32 %v2263, %v2359
    %2376 = vst [vmem:[#allocation13] sm:$0xff] %v2360
    %2377 = vst [vmem:[#allocation13 + $0x8] sm:$0xff] %v2361
    %2378 = vst [vmem:[#allocation13 + $0x10] sm:$0xff] %v2362
    %2379 = vst [vmem:[#allocation13 + $0x18] sm:$0xff] %v2363
    %2380 = vst [vmem:[#allocation13 + $0x20] sm:$0xff] %v2364
    %2381 = vst [vmem:[#allocation13 + $0x28] sm:$0xff] %v2365
    %2382 = vst [vmem:[#allocation13 + $0x30] sm:$0xff] %v2366
    %2383 = vst [vmem:[#allocation13 + $0x38] sm:$0xff] %v2367
    %2384 = vst [vmem:[#allocation13 + $0x40] sm:$0xff] %v2368
    %2385 = vst [vmem:[#allocation13 + $0x48] sm:$0xff] %v2369
    %2386 = vst [vmem:[#allocation13 + $0x50] sm:$0xff] %v2370
    %2387 = vst [vmem:[#allocation13 + $0x58] sm:$0xff] %v2371
    %2388 = vst [vmem:[#allocation13 + $0x60] sm:$0xff] %v2372
    %2389 = vst [vmem:[#allocation13 + $0x68] sm:$0xff] %v2373
    %2390 = vst [vmem:[#allocation13 + $0x70] sm:$0xff] %v2374
    %2391 = vst [vmem:[#allocation13 + $0x78] sm:$0xff] %v2375
    // Predicated region
    $region78: #{tpu_custom_call.1} parent=1 // pred_check
      _
    $region79: #{tpu_custom_call.1} parent=1 // pred_check_branch
      %2393 = sbr.rel (0) target = $region81
    $region80: #{tpu_custom_call.1} parent=1 // pred_region
      %s2395 = ssub.s32 2048, 2048
      %2396 = vsyncadd [#allocation4], %s2395
      %s2397 = sshll.u32 [#allocation13], 4
      %s2398 = int_to_ptr.vmem [resolvable:$true] %s2397
      %2403 = dma.vmem_to_hbm [thread:$0]  %s2398, 2048, %s13, [#allocation4], 128, 128, 8
    $region81: #{tpu_custom_call.1} parent=1 // pred_fallthru
      _
    // Predicated region
    $region82: #{tpu_custom_call.1} parent=1 // pred_check
      _
    $region83: #{tpu_custom_call.1} parent=1 // pred_check_branch
      %2405 = sbr.rel (0) target = $region85
    $region84: #{tpu_custom_call.1} parent=1 // pred_region
      %2406 = dma.done [#allocation4], 2048
    $region85: #{tpu_custom_call.1} parent=1 // pred_fallthru
      _
    %2407 = vsyncpa [#allocation3], 1
    %2408 = vsyncpa [#allocation6], 1
    %2409 = vsyncpa [#allocation9], 1
    %2410 = vsyncpa [#allocation12], 1
    %2411 = vsyncpa [#allocation4], 1

</llo_original>
